<compile_context>
chip_gen: v6e
topology: v6e:2x2x1
jax: 0.10.0
libtpu: 0.0.40
codegen_flags: <defaults>
</compile_context>

<pallas_src>
import functools

import jax
import jax.numpy as jnp
from jax import lax
from jax.experimental import pallas as pl
from jax.experimental.pallas import tpu as pltpu

K = 9        # conv kernel size
STRIDE = 2
PAD = 4
EPS = 1e-5   # BatchNorm eps


# --------------------------------------------------------------------------- #
# Fused kernel: conv1 -> conv2 -> conv3 -> avgpool -> linear for B_TILE samples
# per grid step.  Activations live in the interleaved layout
# (channels, n_positions * B_TILE), column = position*B_TILE + b.
# --------------------------------------------------------------------------- #
def _fused_forward_kernel(x_ref,
                          w1_ref, b1_ref,
                          w2_ref, b2_ref,
                          w3_ref, b3_ref,
                          fcw_ref, fcb_ref, pool_ref,
                          o_ref, *, b_tile, compute_dtype):
    B = b_tile
    cdt = compute_dtype

    x = x_ref[0]                        # (8, (m+1)*B) : 8-phase padded input, bf16
    m = x.shape[1] // B - 1             # = L // 8  (length of every phase dot)

    def conv(xcol, w_ref, b_ref):
        # BN scale already folded into w; epilogue is just +bias, ReLU (f32).
        acc = jnp.dot(w_ref[...], xcol, preferred_element_type=jnp.float32)
        return jnp.maximum(acc + b_ref[...], 0.0)

    def lane_pad(y, npos):
        # zero-pad `npos` positions (= npos*B lanes) on each side, cast to bf16.
        z = jnp.zeros((y.shape[0], npos * B), cdt)
        return jnp.concatenate([z, y.astype(cdt), z], axis=1)

    def cols(off):
        # lane slice selecting positions [off, off+m) of an interleaved array
        return slice(off * B, (off + m) * B)

    # ---- layer 1 (1 -> 16 ch): one dot per output phase r (positions 4s+r). ----
    # Tap k of phase r reads input 8-phase row (2r+k) % 8 at position offset
    # (2r+k)//8, so the whole im2col is two contiguous row blocks of x.  The
    # weight matrix has a 10th zero column so both blocks have even row counts.
    p1 = []
    for r in range(4):
        xcol = jnp.concatenate(
            [x[2 * r:8, cols(0)], x[:2 * r + 2, cols(1)]], axis=0)      # (10, m*B)
        p1.append(conv(xcol, w1_ref, b1_ref))                           # (16, m*B)
    # Padded 4-phase input of layer 2, phase-major rows (row = 16*phase + ch).
    q = lane_pad(jnp.concatenate(p1, axis=0), 1)                        # (64, (m+2)*B)

    # ---- layer 2 (16 -> 32 ch): even / odd output phases. ----
    # even: taps k=0..3 -> phases 0..3 @ off 0, k=4..7 -> @ off 1, k=8 -> ph0 @ off 2
    xcol_e = jnp.concatenate(
        [q[:, cols(0)], q[:, cols(1)], q[:16, cols(2)]], axis=0)        # (144, m*B)
    # odd : k=0,1 -> ph2,3 @ off 0, k=2..5 -> ph0..3 @ off 1, k=6..8 -> ph0..2 @ off 2
    xcol_o = jnp.concatenate(
        [q[32:, cols(0)], q[:, cols(1)], q[:48, cols(2)]], axis=0)      # (144, m*B)
    y2e = conv(xcol_e, w2_ref, b2_ref)                                  # (32, m*B)
    y2o = conv(xcol_o, w2_ref, b2_ref)                                  # (32, m*B)
    # Padded 2-phase input of layer 3 (row = 32*parity + channel).
    eo = lane_pad(jnp.concatenate([y2e, y2o], axis=0), 2)               # (64, (m+4)*B)

    # ---- layer 3 (32 -> 64 ch): dense output. ----
    # taps (k even -> E @ k//2, k odd -> O @ k//2) pair up into 4 full EO blocks
    # plus the final E-only tap.
    xcol3 = jnp.concatenate(
        [eo[:, cols(0)], eo[:, cols(1)], eo[:, cols(2)], eo[:, cols(3)],
         eo[:32, cols(4)]], axis=0)                                     # (288, m*B)
    y3 = conv(xcol3, w3_ref, b3_ref)                                    # (64, m*B) f32

    # ---- AdaptiveAvgPool1d(1) + Flatten + Linear (fused, f32). ----
    # pool_ref is the precomputed (m*B, B) per-sample averaging matrix.
    pooled = jnp.dot(y3, pool_ref[...], preferred_element_type=jnp.float32)   # (64, B)
    logits = jnp.dot(fcw_ref[...], pooled,
                     preferred_element_type=jnp.float32) + fcb_ref[...]       # (ncls, B)
    o_ref[0] = logits.astype(o_ref.dtype)


# --------------------------------------------------------------------------- #
# Wrapper
# --------------------------------------------------------------------------- #
def conv1d_speech_forward(x, params, *, b_tile=8, compute_dtype=jnp.bfloat16):
    """x: (N, 1, L) f32; params as produced by init_params. Returns (N, n_classes)."""
    n, c_in, l = x.shape
    assert c_in == 1
    assert l % 8 == 0, "kernel assumes input length is a multiple of 8"
    assert n % b_tile == 0, "batch must be divisible by b_tile"
    g = n // b_tile
    lr = l // 8 + 1              # length of each of the 8 phases of the padded input
    m3 = l // 8                  # final conv output length
    n_classes = params["fc_w"].shape[0]

    # Fold eval-mode BatchNorm + conv bias: BN scale goes into the bf16 weights,
    # (b - mean)*scale + beta stays as a per-channel f32 bias.
    wcols, biases = [], []
    for (w, b, gamma, beta, mean, var) in params["convs"]:
        c_out, ci, _ = w.shape
        scale = gamma / jnp.sqrt(var + EPS)
        bias = (b - mean) * scale + beta
        wcol = jnp.transpose(w, (0, 2, 1)).reshape(c_out, K * ci)   # col = k*ci + c
        wcols.append((wcol * scale[:, None]).astype(compute_dtype))
        biases.append(bias.reshape(c_out, 1).astype(jnp.float32))
    # Layer 1 gets an extra all-zero 10th tap column (keeps in-kernel sublane
    # slices at even row counts; the extra xcol row is multiplied by zero).
    wcols[0] = jnp.pad(wcols[0], ((0, 0), (0, 1)))

    # One-off relayout of the raw input: zero-pad, split into the 8 phases of the
    # padded signal and interleave the batch inside the position axis
    # (x_in[g, p, j*B + b] = x_pad[g*B + b, 8j + p]).  Tiny one-off XLA ops; bf16.
    x_pad = jnp.pad(x[:, 0, :], ((0, 0), (PAD, PAD)))                        # (n, l+8)
    x_in = (x_pad.reshape(g, b_tile, lr, 8)
            .transpose(0, 3, 2, 1)
            .reshape(g, 8, lr * b_tile)
            .astype(compute_dtype))

    # Precomputed (hoisted) per-sample mean-pool matrix and FC params.
    pool = jnp.tile(jnp.eye(b_tile, dtype=jnp.float32), (m3, 1)) / m3        # (m3*B, B)
    fc_w = params["fc_w"].astype(jnp.float32)                                # (ncls, 64)
    fc_b = params["fc_b"].reshape(n_classes, 1).astype(jnp.float32)

    kernel = functools.partial(_fused_forward_kernel, b_tile=b_tile,
                               compute_dtype=compute_dtype)

    def rep(a):                      # replicated operand: same (full) block every step
        return pl.BlockSpec(a.shape, lambda i, _nd=a.ndim: (0,) * _nd)

    in_specs = [pl.BlockSpec((1, 8, lr * b_tile), lambda i: (i, 0, 0))]
    operands = [x_in]
    for wc, bs in zip(wcols, biases):
        in_specs += [rep(wc), rep(bs)]
        operands += [wc, bs]
    in_specs += [rep(fc_w), rep(fc_b), rep(pool)]
    operands += [fc_w, fc_b, pool]

    out = pl.pallas_call(
        kernel,
        out_shape=jax.ShapeDtypeStruct((g, n_classes, b_tile), jnp.float32),
        grid_spec=pltpu.PrefetchScalarGridSpec(
            num_scalar_prefetch=0,
            grid=(g,),
            in_specs=in_specs,
            out_specs=pl.BlockSpec((1, n_classes, b_tile), lambda i: (i, 0, 0)),
        ),
        compiler_params=pltpu.CompilerParams(
            dimension_semantics=("parallel",)),
    )(*operands)
    # (g, n_classes, B) -> (N, n_classes)
    return jnp.transpose(out, (0, 2, 1)).reshape(n, n_classes)


# --------------------------------------------------------------------------- #
# Deterministic parameter init (PyTorch default-style shapes / scales)
# --------------------------------------------------------------------------- #
def init_params(key, n_classes=10):
    convs = []
    for c_in, c_out in [(1, 16), (16, 32), (32, 64)]:
        key, kw, kb = jax.random.split(key, 3)
        bound = 1.0 / (c_in * K) ** 0.5
        w = jax.random.uniform(kw, (c_out, c_in, K), jnp.float32, -bound, bound)
        b = jax.random.uniform(kb, (c_out,), jnp.float32, -bound, bound)
        gamma = jnp.ones((c_out,), jnp.float32)
        beta = jnp.zeros((c_out,), jnp.float32)
        mean = jnp.zeros((c_out,), jnp.float32)
        var = jnp.ones((c_out,), jnp.float32)
        convs.append((w, b, gamma, beta, mean, var))
    key, kw, kb = jax.random.split(key, 3)
    bound = 1.0 / 64 ** 0.5
    fc_w = jax.random.uniform(kw, (n_classes, 64), jnp.float32, -bound, bound)
    fc_b = jax.random.uniform(kb, (n_classes,), jnp.float32, -bound, bound)
    return {"convs": convs, "fc_w": fc_w, "fc_b": fc_b}


# --------------------------------------------------------------------------- #
# Plain-JAX reference (f32) for the correctness check
# --------------------------------------------------------------------------- #
def ref_forward(x, params):
    h = x
    for (w, b, gamma, beta, mean, var) in params["convs"]:
        h = lax.conv_general_dilated(
            h, w, window_strides=(STRIDE,), padding=[(PAD, PAD)],
            dimension_numbers=("NCH", "OIH", "NCH"))
        h = h + b[None, :, None]
        h = ((h - mean[None, :, None]) / jnp.sqrt(var[None, :, None] + EPS)
             * gamma[None, :, None] + beta[None, :, None])
        h = jnp.maximum(h, 0.0)
    pooled = jnp.mean(h, axis=2)
    return pooled @ params["fc_w"].T + params["fc_b"]


if __name__ == "__main__":
    key = jax.random.PRNGKey(0)
    key, kx = jax.random.split(key)
    # small demo: batch=16 (2 balanced "parallel" grid steps of B_TILE=8), length 512
    #   -> (16,16,256) -> (16,32,128) -> (16,64,64) -> pool -> (16,10)
    x = jax.random.normal(kx, (16, 1, 512), jnp.float32)
    params = init_params(key, n_classes=10)

    fwd = jax.jit(functools.partial(conv1d_speech_forward, b_tile=8))
    out = jax.block_until_ready(fwd(x, params))

    ref = ref_forward(x, params)
    assert out.shape == (16, 10), out.shape
    max_err = float(jnp.max(jnp.abs(out - ref)))
    # conv matmuls run in bf16 (f32 accumulate/epilogue) -> loosened tolerance.
    assert jnp.allclose(out, ref, rtol=2e-2, atol=2e-2), max_err
    print("KERNEL_OK")
</pallas_src>

<mosaic_0001>
module attributes {stable_mosaic.version = 11 : i64} {
  func.func @_fused_forward_kernel(%arg0: i32, %arg1: memref<1x8x520xbf16, #tpu.memory_space<vmem>>, %arg2: memref<16x10xbf16, #tpu.memory_space<vmem>>, %arg3: memref<16x1xf32, #tpu.memory_space<vmem>>, %arg4: memref<32x144xbf16, #tpu.memory_space<vmem>>, %arg5: memref<32x1xf32, #tpu.memory_space<vmem>>, %arg6: memref<64x288xbf16, #tpu.memory_space<vmem>>, %arg7: memref<64x1xf32, #tpu.memory_space<vmem>>, %arg8: memref<10x64xf32, #tpu.memory_space<vmem>>, %arg9: memref<10x1xf32, #tpu.memory_space<vmem>>, %arg10: memref<512x8xf32, #tpu.memory_space<vmem>>, %arg11: memref<1x10x8xf32, #tpu.memory_space<vmem>>) attributes {dimension_semantics = [#tpu.dimension_semantics<parallel>], iteration_bounds = array<i64: 2>, scalar_prefetch = 0 : i64, scratch_operands = 0 : i64, tpu.core_type = #tpu.core_type<tc>, window_params = [{transform_indices = @transform_0, window_bounds = array<i64: 1, 8, 520>}, {pipeline_mode = #tpu.pipeline_mode<synchronous>, transform_indices = @transform_1, window_bounds = array<i64: 16, 10>}, {pipeline_mode = #tpu.pipeline_mode<synchronous>, transform_indices = @transform_2, window_bounds = array<i64: 16, 1>}, {pipeline_mode = #tpu.pipeline_mode<synchronous>, transform_indices = @transform_3, window_bounds = array<i64: 32, 144>}, {pipeline_mode = #tpu.pipeline_mode<synchronous>, transform_indices = @transform_4, window_bounds = array<i64: 32, 1>}, {pipeline_mode = #tpu.pipeline_mode<synchronous>, transform_indices = @transform_5, window_bounds = array<i64: 64, 288>}, {pipeline_mode = #tpu.pipeline_mode<synchronous>, transform_indices = @transform_6, window_bounds = array<i64: 64, 1>}, {pipeline_mode = #tpu.pipeline_mode<synchronous>, transform_indices = @transform_7, window_bounds = array<i64: 10, 64>}, {pipeline_mode = #tpu.pipeline_mode<synchronous>, transform_indices = @transform_8, window_bounds = array<i64: 10, 1>}, {pipeline_mode = #tpu.pipeline_mode<synchronous>, transform_indices = @transform_9, window_bounds = array<i64: 512, 8>}, {transform_indices = @transform_10, window_bounds = array<i64: 1, 10, 8>}]} {
    %c0 = arith.constant 0 : index
    %c0_0 = arith.constant 0 : index
    %c0_1 = arith.constant 0 : index
    %0 = vector.load %arg1[%c0, %c0_0, %c0_1] : memref<1x8x520xbf16, #tpu.memory_space<vmem>>, vector<1x8x520xbf16>
    %1 = vector.shape_cast %0 : vector<1x8x520xbf16> to vector<8x520xbf16>
    %2 = vector.extract_strided_slice %1 {offsets = [0, 0], sizes = [8, 512], strides = [1, 1]} : vector<8x520xbf16> to vector<8x512xbf16>
    %3 = vector.extract_strided_slice %1 {offsets = [0, 8], sizes = [2, 512], strides = [1, 1]} : vector<8x520xbf16> to vector<2x512xbf16>
    %4 = tpu.concatenate %2, %3 in 0 : vector<8x512xbf16>, vector<2x512xbf16> -> vector<10x512xbf16>
    %c0_2 = arith.constant 0 : index
    %c0_3 = arith.constant 0 : index
    %5 = vector.load %arg2[%c0_2, %c0_3] : memref<16x10xbf16, #tpu.memory_space<vmem>>, vector<16x10xbf16>
    %cst = arith.constant dense<0.000000e+00> : vector<16x512xf32>
    %6 = tpu.matmul %5, %4, %cst {dimension_numbers = #tpu.dot_dimension_numbers<[1], [0], [0], [1], [0, 0, 1, 1], [], []>} : vector<16x10xbf16>, vector<10x512xbf16>, vector<16x512xf32> -> vector<16x512xf32>
    %c0_4 = arith.constant 0 : index
    %c0_5 = arith.constant 0 : index
    %7 = vector.load %arg3[%c0_4, %c0_5] : memref<16x1xf32, #tpu.memory_space<vmem>>, vector<16x1xf32>
    %8 = vector.broadcast %7 : vector<16x1xf32> to vector<16x512xf32>
    %9 = arith.addf %6, %8 : vector<16x512xf32>
    %cst_6 = arith.constant 0.000000e+00 : f32
    %10 = vector.broadcast %cst_6 : f32 to vector<16x512xf32>
    %11 = arith.maximumf %9, %10 : vector<16x512xf32>
    %12 = vector.extract_strided_slice %1 {offsets = [2, 0], sizes = [6, 512], strides = [1, 1]} : vector<8x520xbf16> to vector<6x512xbf16>
    %13 = vector.extract_strided_slice %1 {offsets = [0, 8], sizes = [4, 512], strides = [1, 1]} : vector<8x520xbf16> to vector<4x512xbf16>
    %14 = tpu.concatenate %12, %13 in 0 : vector<6x512xbf16>, vector<4x512xbf16> -> vector<10x512xbf16>
    %c0_7 = arith.constant 0 : index
    %c0_8 = arith.constant 0 : index
    %15 = vector.load %arg2[%c0_7, %c0_8] : memref<16x10xbf16, #tpu.memory_space<vmem>>, vector<16x10xbf16>
    %cst_9 = arith.constant dense<0.000000e+00> : vector<16x512xf32>
    %16 = tpu.matmul %15, %14, %cst_9 {dimension_numbers = #tpu.dot_dimension_numbers<[1], [0], [0], [1], [0, 0, 1, 1], [], []>} : vector<16x10xbf16>, vector<10x512xbf16>, vector<16x512xf32> -> vector<16x512xf32>
    %c0_10 = arith.constant 0 : index
    %c0_11 = arith.constant 0 : index
    %17 = vector.load %arg3[%c0_10, %c0_11] : memref<16x1xf32, #tpu.memory_space<vmem>>, vector<16x1xf32>
    %18 = vector.broadcast %17 : vector<16x1xf32> to vector<16x512xf32>
    %19 = arith.addf %16, %18 : vector<16x512xf32>
    %cst_12 = arith.constant 0.000000e+00 : f32
    %20 = vector.broadcast %cst_12 : f32 to vector<16x512xf32>
    %21 = arith.maximumf %19, %20 : vector<16x512xf32>
    %22 = vector.extract_strided_slice %1 {offsets = [4, 0], sizes = [4, 512], strides = [1, 1]} : vector<8x520xbf16> to vector<4x512xbf16>
    %23 = vector.extract_strided_slice %1 {offsets = [0, 8], sizes = [6, 512], strides = [1, 1]} : vector<8x520xbf16> to vector<6x512xbf16>
    %24 = tpu.concatenate %22, %23 in 0 : vector<4x512xbf16>, vector<6x512xbf16> -> vector<10x512xbf16>
    %c0_13 = arith.constant 0 : index
    %c0_14 = arith.constant 0 : index
    %25 = vector.load %arg2[%c0_13, %c0_14] : memref<16x10xbf16, #tpu.memory_space<vmem>>, vector<16x10xbf16>
    %cst_15 = arith.constant dense<0.000000e+00> : vector<16x512xf32>
    %26 = tpu.matmul %25, %24, %cst_15 {dimension_numbers = #tpu.dot_dimension_numbers<[1], [0], [0], [1], [0, 0, 1, 1], [], []>} : vector<16x10xbf16>, vector<10x512xbf16>, vector<16x512xf32> -> vector<16x512xf32>
    %c0_16 = arith.constant 0 : index
    %c0_17 = arith.constant 0 : index
    %27 = vector.load %arg3[%c0_16, %c0_17] : memref<16x1xf32, #tpu.memory_space<vmem>>, vector<16x1xf32>
    %28 = vector.broadcast %27 : vector<16x1xf32> to vector<16x512xf32>
    %29 = arith.addf %26, %28 : vector<16x512xf32>
    %cst_18 = arith.constant 0.000000e+00 : f32
    %30 = vector.broadcast %cst_18 : f32 to vector<16x512xf32>
    %31 = arith.maximumf %29, %30 : vector<16x512xf32>
    %32 = vector.extract_strided_slice %1 {offsets = [6, 0], sizes = [2, 512], strides = [1, 1]} : vector<8x520xbf16> to vector<2x512xbf16>
    %33 = vector.extract_strided_slice %1 {offsets = [0, 8], sizes = [8, 512], strides = [1, 1]} : vector<8x520xbf16> to vector<8x512xbf16>
    %34 = tpu.concatenate %32, %33 in 0 : vector<2x512xbf16>, vector<8x512xbf16> -> vector<10x512xbf16>
    %c0_19 = arith.constant 0 : index
    %c0_20 = arith.constant 0 : index
    %35 = vector.load %arg2[%c0_19, %c0_20] : memref<16x10xbf16, #tpu.memory_space<vmem>>, vector<16x10xbf16>
    %cst_21 = arith.constant dense<0.000000e+00> : vector<16x512xf32>
    %36 = tpu.matmul %35, %34, %cst_21 {dimension_numbers = #tpu.dot_dimension_numbers<[1], [0], [0], [1], [0, 0, 1, 1], [], []>} : vector<16x10xbf16>, vector<10x512xbf16>, vector<16x512xf32> -> vector<16x512xf32>
    %c0_22 = arith.constant 0 : index
    %c0_23 = arith.constant 0 : index
    %37 = vector.load %arg3[%c0_22, %c0_23] : memref<16x1xf32, #tpu.memory_space<vmem>>, vector<16x1xf32>
    %38 = vector.broadcast %37 : vector<16x1xf32> to vector<16x512xf32>
    %39 = arith.addf %36, %38 : vector<16x512xf32>
    %cst_24 = arith.constant 0.000000e+00 : f32
    %40 = vector.broadcast %cst_24 : f32 to vector<16x512xf32>
    %41 = arith.maximumf %39, %40 : vector<16x512xf32>
    %42 = tpu.concatenate %11, %21, %31, %41 in 0 : vector<16x512xf32>, vector<16x512xf32>, vector<16x512xf32>, vector<16x512xf32> -> vector<64x512xf32>
    %cst_25 = arith.constant 0.000000e+00 : bf16
    %43 = vector.broadcast %cst_25 : bf16 to vector<64x8xbf16>
    %44 = arith.truncf %42 : vector<64x512xf32> to vector<64x512xbf16>
    %45 = tpu.concatenate %43, %44, %43 in 1 : vector<64x8xbf16>, vector<64x512xbf16>, vector<64x8xbf16> -> vector<64x528xbf16>
    %46 = vector.extract_strided_slice %45 {offsets = [0, 0], sizes = [64, 512], strides = [1, 1]} : vector<64x528xbf16> to vector<64x512xbf16>
    %47 = vector.extract_strided_slice %45 {offsets = [0, 8], sizes = [64, 512], strides = [1, 1]} : vector<64x528xbf16> to vector<64x512xbf16>
    %48 = vector.extract_strided_slice %45 {offsets = [0, 16], sizes = [16, 512], strides = [1, 1]} : vector<64x528xbf16> to vector<16x512xbf16>
    %49 = tpu.concatenate %46, %47, %48 in 0 : vector<64x512xbf16>, vector<64x512xbf16>, vector<16x512xbf16> -> vector<144x512xbf16>
    %50 = vector.extract_strided_slice %45 {offsets = [32, 0], sizes = [32, 512], strides = [1, 1]} : vector<64x528xbf16> to vector<32x512xbf16>
    %51 = vector.extract_strided_slice %45 {offsets = [0, 8], sizes = [64, 512], strides = [1, 1]} : vector<64x528xbf16> to vector<64x512xbf16>
    %52 = vector.extract_strided_slice %45 {offsets = [0, 16], sizes = [48, 512], strides = [1, 1]} : vector<64x528xbf16> to vector<48x512xbf16>
    %53 = tpu.concatenate %50, %51, %52 in 0 : vector<32x512xbf16>, vector<64x512xbf16>, vector<48x512xbf16> -> vector<144x512xbf16>
    %c0_26 = arith.constant 0 : index
    %c0_27 = arith.constant 0 : index
    %54 = vector.load %arg4[%c0_26, %c0_27] : memref<32x144xbf16, #tpu.memory_space<vmem>>, vector<32x144xbf16>
    %cst_28 = arith.constant dense<0.000000e+00> : vector<32x512xf32>
    %55 = tpu.matmul %54, %49, %cst_28 {dimension_numbers = #tpu.dot_dimension_numbers<[1], [0], [0], [1], [0, 0, 1, 1], [], []>} : vector<32x144xbf16>, vector<144x512xbf16>, vector<32x512xf32> -> vector<32x512xf32>
    %c0_29 = arith.constant 0 : index
    %c0_30 = arith.constant 0 : index
    %56 = vector.load %arg5[%c0_29, %c0_30] : memref<32x1xf32, #tpu.memory_space<vmem>>, vector<32x1xf32>
    %57 = vector.broadcast %56 : vector<32x1xf32> to vector<32x512xf32>
    %58 = arith.addf %55, %57 : vector<32x512xf32>
    %cst_31 = arith.constant 0.000000e+00 : f32
    %59 = vector.broadcast %cst_31 : f32 to vector<32x512xf32>
    %60 = arith.maximumf %58, %59 : vector<32x512xf32>
    %c0_32 = arith.constant 0 : index
    %c0_33 = arith.constant 0 : index
    %61 = vector.load %arg4[%c0_32, %c0_33] : memref<32x144xbf16, #tpu.memory_space<vmem>>, vector<32x144xbf16>
    %cst_34 = arith.constant dense<0.000000e+00> : vector<32x512xf32>
    %62 = tpu.matmul %61, %53, %cst_34 {dimension_numbers = #tpu.dot_dimension_numbers<[1], [0], [0], [1], [0, 0, 1, 1], [], []>} : vector<32x144xbf16>, vector<144x512xbf16>, vector<32x512xf32> -> vector<32x512xf32>
    %c0_35 = arith.constant 0 : index
    %c0_36 = arith.constant 0 : index
    %63 = vector.load %arg5[%c0_35, %c0_36] : memref<32x1xf32, #tpu.memory_space<vmem>>, vector<32x1xf32>
    %64 = vector.broadcast %63 : vector<32x1xf32> to vector<32x512xf32>
    %65 = arith.addf %62, %64 : vector<32x512xf32>
    %cst_37 = arith.constant 0.000000e+00 : f32
    %66 = vector.broadcast %cst_37 : f32 to vector<32x512xf32>
    %67 = arith.maximumf %65, %66 : vector<32x512xf32>
    %68 = tpu.concatenate %60, %67 in 0 : vector<32x512xf32>, vector<32x512xf32> -> vector<64x512xf32>
    %cst_38 = arith.constant 0.000000e+00 : bf16
    %69 = vector.broadcast %cst_38 : bf16 to vector<64x16xbf16>
    %70 = arith.truncf %68 : vector<64x512xf32> to vector<64x512xbf16>
    %71 = tpu.concatenate %69, %70, %69 in 1 : vector<64x16xbf16>, vector<64x512xbf16>, vector<64x16xbf16> -> vector<64x544xbf16>
    %72 = vector.extract_strided_slice %71 {offsets = [0, 0], sizes = [64, 512], strides = [1, 1]} : vector<64x544xbf16> to vector<64x512xbf16>
    %73 = vector.extract_strided_slice %71 {offsets = [0, 8], sizes = [64, 512], strides = [1, 1]} : vector<64x544xbf16> to vector<64x512xbf16>
    %74 = vector.extract_strided_slice %71 {offsets = [0, 16], sizes = [64, 512], strides = [1, 1]} : vector<64x544xbf16> to vector<64x512xbf16>
    %75 = vector.extract_strided_slice %71 {offsets = [0, 24], sizes = [64, 512], strides = [1, 1]} : vector<64x544xbf16> to vector<64x512xbf16>
    %76 = vector.extract_strided_slice %71 {offsets = [0, 32], sizes = [32, 512], strides = [1, 1]} : vector<64x544xbf16> to vector<32x512xbf16>
    %77 = tpu.concatenate %72, %73, %74, %75, %76 in 0 : vector<64x512xbf16>, vector<64x512xbf16>, vector<64x512xbf16>, vector<64x512xbf16>, vector<32x512xbf16> -> vector<288x512xbf16>
    %c0_39 = arith.constant 0 : index
    %c0_40 = arith.constant 0 : index
    %78 = vector.load %arg6[%c0_39, %c0_40] : memref<64x288xbf16, #tpu.memory_space<vmem>>, vector<64x288xbf16>
    %cst_41 = arith.constant dense<0.000000e+00> : vector<64x512xf32>
    %79 = tpu.matmul %78, %77, %cst_41 {dimension_numbers = #tpu.dot_dimension_numbers<[1], [0], [0], [1], [0, 0, 1, 1], [], []>} : vector<64x288xbf16>, vector<288x512xbf16>, vector<64x512xf32> -> vector<64x512xf32>
    %c0_42 = arith.constant 0 : index
    %c0_43 = arith.constant 0 : index
    %80 = vector.load %arg7[%c0_42, %c0_43] : memref<64x1xf32, #tpu.memory_space<vmem>>, vector<64x1xf32>
    %81 = vector.broadcast %80 : vector<64x1xf32> to vector<64x512xf32>
    %82 = arith.addf %79, %81 : vector<64x512xf32>
    %cst_44 = arith.constant 0.000000e+00 : f32
    %83 = vector.broadcast %cst_44 : f32 to vector<64x512xf32>
    %84 = arith.maximumf %82, %83 : vector<64x512xf32>
    %c0_45 = arith.constant 0 : index
    %c0_46 = arith.constant 0 : index
    %85 = vector.load %arg10[%c0_45, %c0_46] : memref<512x8xf32, #tpu.memory_space<vmem>>, vector<512x8xf32>
    %cst_47 = arith.constant dense<0.000000e+00> : vector<64x8xf32>
    %86 = tpu.matmul %84, %85, %cst_47 {dimension_numbers = #tpu.dot_dimension_numbers<[1], [0], [0], [1], [0, 0, 1, 1], [], []>} : vector<64x512xf32>, vector<512x8xf32>, vector<64x8xf32> -> vector<64x8xf32>
    %c0_48 = arith.constant 0 : index
    %c0_49 = arith.constant 0 : index
    %87 = vector.load %arg8[%c0_48, %c0_49] : memref<10x64xf32, #tpu.memory_space<vmem>>, vector<10x64xf32>
    %cst_50 = arith.constant dense<0.000000e+00> : vector<10x8xf32>
    %88 = tpu.matmul %87, %86, %cst_50 {dimension_numbers = #tpu.dot_dimension_numbers<[1], [0], [0], [1], [0, 0, 1, 1], [], []>} : vector<10x64xf32>, vector<64x8xf32>, vector<10x8xf32> -> vector<10x8xf32>
    %c0_51 = arith.constant 0 : index
    %c0_52 = arith.constant 0 : index
    %89 = vector.load %arg9[%c0_51, %c0_52] : memref<10x1xf32, #tpu.memory_space<vmem>>, vector<10x1xf32>
    %90 = vector.broadcast %89 : vector<10x1xf32> to vector<10x8xf32>
    %91 = arith.addf %88, %90 : vector<10x8xf32>
    %c0_53 = arith.constant 0 : index
    %c0_54 = arith.constant 0 : index
    %c0_55 = arith.constant 0 : index
    %92 = vector.load %arg11[%c0_53, %c0_54, %c0_55] : memref<1x10x8xf32, #tpu.memory_space<vmem>>, vector<1x10x8xf32>
    %93 = vector.shape_cast %92 : vector<1x10x8xf32> to vector<10x8xf32>
    %94 = vector.shape_cast %91 : vector<10x8xf32> to vector<1x10x8xf32>
    tpu.vector_store %arg11[%c0_53, %c0_54, %c0_55], %94 {strides = array<i32>} : memref<1x10x8xf32, #tpu.memory_space<vmem>>, vector<1x10x8xf32>,
    return
  }
  func.func @transform_0(%arg0: i32) -> (i32, i32, i32) {
    %c0_i32 = arith.constant 0 : i32
    %c0_i32_0 = arith.constant 0 : i32
    %c0_i32_1 = arith.constant 0 : i32
    return %arg0, %c0_i32, %c0_i32_0 : i32, i32, i32
  }
  func.func @transform_1(%arg0: i32) -> (i32, i32) {
    %c0_i32 = arith.constant 0 : i32
    %c0_i32_0 = arith.constant 0 : i32
    %c0_i32_1 = arith.constant 0 : i32
    return %c0_i32, %c0_i32_0 : i32, i32
  }
  func.func @transform_2(%arg0: i32) -> (i32, i32) {
    %c0_i32 = arith.constant 0 : i32
    %c0_i32_0 = arith.constant 0 : i32
    %c0_i32_1 = arith.constant 0 : i32
    return %c0_i32, %c0_i32_0 : i32, i32
  }
  func.func @transform_3(%arg0: i32) -> (i32, i32) {
    %c0_i32 = arith.constant 0 : i32
    %c0_i32_0 = arith.constant 0 : i32
    %c0_i32_1 = arith.constant 0 : i32
    return %c0_i32, %c0_i32_0 : i32, i32
  }
  func.func @transform_4(%arg0: i32) -> (i32, i32) {
    %c0_i32 = arith.constant 0 : i32
    %c0_i32_0 = arith.constant 0 : i32
    %c0_i32_1 = arith.constant 0 : i32
    return %c0_i32, %c0_i32_0 : i32, i32
  }
  func.func @transform_5(%arg0: i32) -> (i32, i32) {
    %c0_i32 = arith.constant 0 : i32
    %c0_i32_0 = arith.constant 0 : i32
    %c0_i32_1 = arith.constant 0 : i32
    return %c0_i32, %c0_i32_0 : i32, i32
  }
  func.func @transform_6(%arg0: i32) -> (i32, i32) {
    %c0_i32 = arith.constant 0 : i32
    %c0_i32_0 = arith.constant 0 : i32
    %c0_i32_1 = arith.constant 0 : i32
    return %c0_i32, %c0_i32_0 : i32, i32
  }
  func.func @transform_7(%arg0: i32) -> (i32, i32) {
    %c0_i32 = arith.constant 0 : i32
    %c0_i32_0 = arith.constant 0 : i32
    %c0_i32_1 = arith.constant 0 : i32
    return %c0_i32, %c0_i32_0 : i32, i32
  }
  func.func @transform_8(%arg0: i32) -> (i32, i32) {
    %c0_i32 = arith.constant 0 : i32
    %c0_i32_0 = arith.constant 0 : i32
    %c0_i32_1 = arith.constant 0 : i32
    return %c0_i32, %c0_i32_0 : i32, i32
  }
  func.func @transform_9(%arg0: i32) -> (i32, i32) {
    %c0_i32 = arith.constant 0 : i32
    %c0_i32_0 = arith.constant 0 : i32
    %c0_i32_1 = arith.constant 0 : i32
    return %c0_i32, %c0_i32_0 : i32, i32
  }
  func.func @transform_10(%arg0: i32) -> (i32, i32, i32) {
    %c0_i32 = arith.constant 0 : i32
    %c0_i32_0 = arith.constant 0 : i32
    %c0_i32_1 = arith.constant 0 : i32
    return %arg0, %c0_i32, %c0_i32_0 : i32, i32, i32
  }
}

</mosaic_0001>

<llo_original>
// kernel: conv1d_speech_forward.1
$region0: #{conv1d_speech_forward.1}
  #allocation0 [shape = 'u32[]', space=smem, size = 0x4, offset = 0x4, fixed_abs, tag = 'smem constant byte address 0x4 - core index']
  #allocation1 [shape = 'u32[144,128]{1,0:T(1,128)}', space=vmem, size = 0x12000, scoped, tag = 'internal scratch']
  %s0 = inlined_call_operand.vmem [shape: bf16[2,8,520], index: 0, kind: input, shape index: {}]
  %s1 = inlined_call_operand.vmem [shape: bf16[16,10], index: 1, kind: input, shape index: {}]
  %s2 = inlined_call_operand.vmem [shape: f32[16,1], index: 2, kind: input, shape index: {}]
  %s3 = inlined_call_operand.vmem [shape: bf16[32,144], index: 3, kind: input, shape index: {}]
  %s4 = inlined_call_operand.vmem [shape: f32[32,1], index: 4, kind: input, shape index: {}]
  %s5 = inlined_call_operand.vmem [shape: bf16[64,288], index: 5, kind: input, shape index: {}]
  %s6 = inlined_call_operand.vmem [shape: f32[64,1], index: 6, kind: input, shape index: {}]
  %s7 = inlined_call_operand.vmem [shape: f32[10,64], index: 7, kind: input, shape index: {}]
  %s8 = inlined_call_operand.vmem [shape: f32[10,1], index: 8, kind: input, shape index: {}]
  %s9 = inlined_call_operand.vmem [shape: f32[512,8], index: 9, kind: input, shape index: {}]
  %s10 = inlined_call_operand.vmem [shape: f32[2,10,8], index: 10, kind: output, shape index: {}]
  %s11 = sld [smem:[#allocation0]]
  $region73: #{conv1d_speech_forward.1} parent=0
    _
  %s13 = ssub.s32 1, %s11
  %s14 = scalar_select 0, %s13, %s11
  loop: start=0, step=1, limit=4
  $region2: #{conv1d_speech_forward.1} parent=0 // loop_pre_header
    _
  $region3: #{conv1d_speech_forward.1} parent=0 // loop_header
    %s16 = sphi 0, %s20
    %p17 = scmp.ge.s32.totalorder %s16, 4
    %s26 = sphi 0, %s28
    %s29 = sphi 0, %s26
    %s30 = sphi 0, %s29
    %s46 = sphi 0, %s30
    %s50 = sphi 0, %s50
    %s52 = sphi 0, %s50
    %s53 = sphi 0, %s52
    %s67 = sphi 0, %s53
    %s71 = sphi 0, %s71
    %s73 = sphi 0, %s71
    %s74 = sphi 0, %s73
    %s88 = sphi 0, %s74
    %s92 = sphi 0, %s92
    %s94 = sphi 0, %s92
    %s95 = sphi 0, %s94
    %s109 = sphi 0, %s95
    %s113 = sphi 0, %s113
    %s115 = sphi 0, %s113
    %s116 = sphi 0, %s115
    %s130 = sphi 0, %s116
    %s134 = sphi 0, %s134
    %s136 = sphi 0, %s134
    %s137 = sphi 0, %s136
    %s151 = sphi 0, %s137
    %s155 = sphi 0, %s155
    %s157 = sphi 0, %s155
    %s158 = sphi 0, %s157
    %s172 = sphi 0, %s158
    %s176 = sphi 0, %s176
    %s178 = sphi 0, %s176
    %s179 = sphi 0, %s178
    %s193 = sphi 0, %s179
    %s197 = sphi 0, %s197
    %s199 = sphi 0, %s197
    %s200 = sphi 0, %s199
    %s214 = sphi 0, %s200
    %s218 = sphi 0, %s218
    %s220 = sphi 0, %s218
    %s221 = sphi 0, %s220
    %s235 = sphi 0, %s221
    %s241 = sphi 0, %s243
    %s244 = sphi 0, %s241
    %s245 = sphi 0, %s244
    %s261 = sphi 0, %s245
  $region4: #{conv1d_speech_forward.1} parent=0 // loop_header_branch
    %19 = sbr.rel (%p17) target = $region8
  $region5: #{conv1d_speech_forward.1} parent=0 // loop_body
    %s21 = ssub.s32 %s16, 1
    %s22 = ssub.s32 %s16, 2
    %s23 = sadd.s32 %s16, 1
    %s24 = ssub.s32 %s16, %s23
    %p25 = scmp.eq.s32.totalorder %s24, 0
    %s27 = sadd.s32 %s26, 1
    %s28 = scalar_select %p25, %s26, %s27
    %p31 = pneg %p25
    %p32 = scmp.eq.s32.totalorder %s16, 1
    %p33 = por %p31, %p32
    %p34 = scmp.ne.s32.totalorder %s26, %s29
    %p35 = scmp.eq.s32.totalorder %s16, 0
    %p36 = por %p34, %p35
    %p37 = scmp.ne.s32.totalorder %s26, %s29
    %p38 = scmp.eq.s32.totalorder %s21, 1
    %p39 = por %p37, %p38
    %p40 = scmp.ne.s32.totalorder %s29, %s30
    %p41 = scmp.eq.s32.totalorder %s21, 0
    %p42 = por %p40, %p41
    %p43 = scmp.ne.s32.totalorder %s29, %s30
    %p44 = scmp.eq.s32.totalorder %s22, 1
    %p45 = por %p43, %p44
    %p47 = scmp.ne.s32.totalorder %s30, %s46
    %p48 = scmp.eq.s32.totalorder %s22, 0
    %p49 = por %p47, %p48
    %s51 = sadd.s32 %s50, 1
    %p54 = scmp.eq.s32.totalorder %s16, 1
    %p55 = scmp.ne.s32.totalorder %s50, %s52
    %p56 = scmp.eq.s32.totalorder %s16, 0
    %p57 = por %p55, %p56
    %p58 = scmp.ne.s32.totalorder %s50, %s52
    %p59 = scmp.eq.s32.totalorder %s21, 1
    %p60 = por %p58, %p59
    %p61 = scmp.ne.s32.totalorder %s52, %s53
    %p62 = scmp.eq.s32.totalorder %s21, 0
    %p63 = por %p61, %p62
    %p64 = scmp.ne.s32.totalorder %s52, %s53
    %p65 = scmp.eq.s32.totalorder %s22, 1
    %p66 = por %p64, %p65
    %p68 = scmp.ne.s32.totalorder %s53, %s67
    %p69 = scmp.eq.s32.totalorder %s22, 0
    %p70 = por %p68, %p69
    %s72 = sadd.s32 %s71, 1
    %p75 = scmp.eq.s32.totalorder %s16, 1
    %p76 = scmp.ne.s32.totalorder %s71, %s73
    %p77 = scmp.eq.s32.totalorder %s16, 0
    %p78 = por %p76, %p77
    %p79 = scmp.ne.s32.totalorder %s71, %s73
    %p80 = scmp.eq.s32.totalorder %s21, 1
    %p81 = por %p79, %p80
    %p82 = scmp.ne.s32.totalorder %s73, %s74
    %p83 = scmp.eq.s32.totalorder %s21, 0
    %p84 = por %p82, %p83
    %p85 = scmp.ne.s32.totalorder %s73, %s74
    %p86 = scmp.eq.s32.totalorder %s22, 1
    %p87 = por %p85, %p86
    %p89 = scmp.ne.s32.totalorder %s74, %s88
    %p90 = scmp.eq.s32.totalorder %s22, 0
    %p91 = por %p89, %p90
    %s93 = sadd.s32 %s92, 1
    %p96 = scmp.eq.s32.totalorder %s16, 1
    %p97 = scmp.ne.s32.totalorder %s92, %s94
    %p98 = scmp.eq.s32.totalorder %s16, 0
    %p99 = por %p97, %p98
    %p100 = scmp.ne.s32.totalorder %s92, %s94
    %p101 = scmp.eq.s32.totalorder %s21, 1
    %p102 = por %p100, %p101
    %p103 = scmp.ne.s32.totalorder %s94, %s95
    %p104 = scmp.eq.s32.totalorder %s21, 0
    %p105 = por %p103, %p104
    %p106 = scmp.ne.s32.totalorder %s94, %s95
    %p107 = scmp.eq.s32.totalorder %s22, 1
    %p108 = por %p106, %p107
    %p110 = scmp.ne.s32.totalorder %s95, %s109
    %p111 = scmp.eq.s32.totalorder %s22, 0
    %p112 = por %p110, %p111
    %s114 = sadd.s32 %s113, 1
    %p117 = scmp.eq.s32.totalorder %s16, 1
    %p118 = scmp.ne.s32.totalorder %s113, %s115
    %p119 = scmp.eq.s32.totalorder %s16, 0
    %p120 = por %p118, %p119
    %p121 = scmp.ne.s32.totalorder %s113, %s115
    %p122 = scmp.eq.s32.totalorder %s21, 1
    %p123 = por %p121, %p122
    %p124 = scmp.ne.s32.totalorder %s115, %s116
    %p125 = scmp.eq.s32.totalorder %s21, 0
    %p126 = por %p124, %p125
    %p127 = scmp.ne.s32.totalorder %s115, %s116
    %p128 = scmp.eq.s32.totalorder %s22, 1
    %p129 = por %p127, %p128
    %p131 = scmp.ne.s32.totalorder %s116, %s130
    %p132 = scmp.eq.s32.totalorder %s22, 0
    %p133 = por %p131, %p132
    %s135 = sadd.s32 %s134, 1
    %p138 = scmp.eq.s32.totalorder %s16, 1
    %p139 = scmp.ne.s32.totalorder %s134, %s136
    %p140 = scmp.eq.s32.totalorder %s16, 0
    %p141 = por %p139, %p140
    %p142 = scmp.ne.s32.totalorder %s134, %s136
    %p143 = scmp.eq.s32.totalorder %s21, 1
    %p144 = por %p142, %p143
    %p145 = scmp.ne.s32.totalorder %s136, %s137
    %p146 = scmp.eq.s32.totalorder %s21, 0
    %p147 = por %p145, %p146
    %p148 = scmp.ne.s32.totalorder %s136, %s137
    %p149 = scmp.eq.s32.totalorder %s22, 1
    %p150 = por %p148, %p149
    %p152 = scmp.ne.s32.totalorder %s137, %s151
    %p153 = scmp.eq.s32.totalorder %s22, 0
    %p154 = por %p152, %p153
    %s156 = sadd.s32 %s155, 1
    %p159 = scmp.eq.s32.totalorder %s16, 1
    %p160 = scmp.ne.s32.totalorder %s155, %s157
    %p161 = scmp.eq.s32.totalorder %s16, 0
    %p162 = por %p160, %p161
    %p163 = scmp.ne.s32.totalorder %s155, %s157
    %p164 = scmp.eq.s32.totalorder %s21, 1
    %p165 = por %p163, %p164
    %p166 = scmp.ne.s32.totalorder %s157, %s158
    %p167 = scmp.eq.s32.totalorder %s21, 0
    %p168 = por %p166, %p167
    %p169 = scmp.ne.s32.totalorder %s157, %s158
    %p170 = scmp.eq.s32.totalorder %s22, 1
    %p171 = por %p169, %p170
    %p173 = scmp.ne.s32.totalorder %s158, %s172
    %p174 = scmp.eq.s32.totalorder %s22, 0
    %p175 = por %p173, %p174
    %s177 = sadd.s32 %s176, 1
    %p180 = scmp.eq.s32.totalorder %s16, 1
    %p181 = scmp.ne.s32.totalorder %s176, %s178
    %p182 = scmp.eq.s32.totalorder %s16, 0
    %p183 = por %p181, %p182
    %p184 = scmp.ne.s32.totalorder %s176, %s178
    %p185 = scmp.eq.s32.totalorder %s21, 1
    %p186 = por %p184, %p185
    %p187 = scmp.ne.s32.totalorder %s178, %s179
    %p188 = scmp.eq.s32.totalorder %s21, 0
    %p189 = por %p187, %p188
    %p190 = scmp.ne.s32.totalorder %s178, %s179
    %p191 = scmp.eq.s32.totalorder %s22, 1
    %p192 = por %p190, %p191
    %p194 = scmp.ne.s32.totalorder %s179, %s193
    %p195 = scmp.eq.s32.totalorder %s22, 0
    %p196 = por %p194, %p195
    %s198 = sadd.s32 %s197, 1
    %p201 = scmp.eq.s32.totalorder %s16, 1
    %p202 = scmp.ne.s32.totalorder %s197, %s199
    %p203 = scmp.eq.s32.totalorder %s16, 0
    %p204 = por %p202, %p203
    %p205 = scmp.ne.s32.totalorder %s197, %s199
    %p206 = scmp.eq.s32.totalorder %s21, 1
    %p207 = por %p205, %p206
    %p208 = scmp.ne.s32.totalorder %s199, %s200
    %p209 = scmp.eq.s32.totalorder %s21, 0
    %p210 = por %p208, %p209
    %p211 = scmp.ne.s32.totalorder %s199, %s200
    %p212 = scmp.eq.s32.totalorder %s22, 1
    %p213 = por %p211, %p212
    %p215 = scmp.ne.s32.totalorder %s200, %s214
    %p216 = scmp.eq.s32.totalorder %s22, 0
    %p217 = por %p215, %p216
    %s219 = sadd.s32 %s218, 1
    %p222 = scmp.eq.s32.totalorder %s16, 1
    %p223 = scmp.ne.s32.totalorder %s218, %s220
    %p224 = scmp.eq.s32.totalorder %s16, 0
    %p225 = por %p223, %p224
    %p226 = scmp.ne.s32.totalorder %s218, %s220
    %p227 = scmp.eq.s32.totalorder %s21, 1
    %p228 = por %p226, %p227
    %p229 = scmp.ne.s32.totalorder %s220, %s221
    %p230 = scmp.eq.s32.totalorder %s21, 0
    %p231 = por %p229, %p230
    %p232 = scmp.ne.s32.totalorder %s220, %s221
    %p233 = scmp.eq.s32.totalorder %s22, 1
    %p234 = por %p232, %p233
    %p236 = scmp.ne.s32.totalorder %s221, %s235
    %p237 = scmp.eq.s32.totalorder %s22, 0
    %p238 = por %p236, %p237
    %s239 = ssub.s32 %s16, %s23
    %p240 = scmp.eq.s32.totalorder %s239, 0
    %s242 = sadd.s32 %s241, 1
    %s243 = scalar_select %p240, %s241, %s242
    %p246 = pneg %p240
    %p247 = scmp.eq.s32.totalorder %s16, 1
    %p248 = por %p246, %p247
    %p249 = scmp.ne.s32.totalorder %s241, %s244
    %p250 = scmp.eq.s32.totalorder %s16, 0
    %p251 = por %p249, %p250
    %p252 = scmp.ne.s32.totalorder %s241, %s244
    %p253 = scmp.eq.s32.totalorder %s21, 1
    %p254 = por %p252, %p253
    %p255 = scmp.ne.s32.totalorder %s244, %s245
    %p256 = scmp.eq.s32.totalorder %s21, 0
    %p257 = por %p255, %p256
    %p258 = scmp.ne.s32.totalorder %s244, %s245
    %p259 = scmp.eq.s32.totalorder %s22, 1
    %p260 = por %p258, %p259
    %p262 = scmp.ne.s32.totalorder %s245, %s261
    %p263 = scmp.eq.s32.totalorder %s22, 0
    %p264 = por %p262, %p263
    %p265 = scmp.le.s32.totalorder 1, %s16
    %p266 = scmp.lt.s32.totalorder %s16, 3
    %p267 = pnand %p265, %p266
    %p268 = pneg %p267
    // Predicated region
    $region9: #{conv1d_speech_forward.1} parent=5 // pred_check
      _
    $region10: #{conv1d_speech_forward.1} parent=5 // pred_check_branch
      %270 = sbr.rel (%p267) target = $region12
    $region11: #{conv1d_speech_forward.1} parent=5 // pred_region
      %s271 = ssub.s32 %s16, 1
      // Predicated region
      $region13: #{conv1d_speech_forward.1} parent=11 // pred_check
        %p272 = pneg %p63
      $region14: #{conv1d_speech_forward.1} parent=11 // pred_check_branch
        %274 = sbr.rel (%p272) target = $region16
      $region15: #{conv1d_speech_forward.1} parent=11 // pred_region
        _
      $region16: #{conv1d_speech_forward.1} parent=11 // pred_fallthru
        _
      // Predicated region
      $region17: #{conv1d_speech_forward.1} parent=11 // pred_check
        %p275 = pneg %p84
      $region18: #{conv1d_speech_forward.1} parent=11 // pred_check_branch
        %277 = sbr.rel (%p275) target = $region20
      $region19: #{conv1d_speech_forward.1} parent=11 // pred_region
        _
      $region20: #{conv1d_speech_forward.1} parent=11 // pred_fallthru
        _
      // Predicated region
      $region21: #{conv1d_speech_forward.1} parent=11 // pred_check
        %p278 = pneg %p105
      $region22: #{conv1d_speech_forward.1} parent=11 // pred_check_branch
        %280 = sbr.rel (%p278) target = $region24
      $region23: #{conv1d_speech_forward.1} parent=11 // pred_region
        _
      $region24: #{conv1d_speech_forward.1} parent=11 // pred_fallthru
        _
      // Predicated region
      $region25: #{conv1d_speech_forward.1} parent=11 // pred_check
        %p281 = pneg %p126
      $region26: #{conv1d_speech_forward.1} parent=11 // pred_check_branch
        %283 = sbr.rel (%p281) target = $region28
      $region27: #{conv1d_speech_forward.1} parent=11 // pred_region
        _
      $region28: #{conv1d_speech_forward.1} parent=11 // pred_fallthru
        _
      // Predicated region
      $region29: #{conv1d_speech_forward.1} parent=11 // pred_check
        %p284 = pneg %p147
      $region30: #{conv1d_speech_forward.1} parent=11 // pred_check_branch
        %286 = sbr.rel (%p284) target = $region32
      $region31: #{conv1d_speech_forward.1} parent=11 // pred_region
        _
      $region32: #{conv1d_speech_forward.1} parent=11 // pred_fallthru
        _
      // Predicated region
      $region33: #{conv1d_speech_forward.1} parent=11 // pred_check
        %p287 = pneg %p168
      $region34: #{conv1d_speech_forward.1} parent=11 // pred_check_branch
        %289 = sbr.rel (%p287) target = $region36
      $region35: #{conv1d_speech_forward.1} parent=11 // pred_region
        _
      $region36: #{conv1d_speech_forward.1} parent=11 // pred_fallthru
        _
      // Predicated region
      $region37: #{conv1d_speech_forward.1} parent=11 // pred_check
        %p290 = pneg %p189
      $region38: #{conv1d_speech_forward.1} parent=11 // pred_check_branch
        %292 = sbr.rel (%p290) target = $region40
      $region39: #{conv1d_speech_forward.1} parent=11 // pred_region
        _
      $region40: #{conv1d_speech_forward.1} parent=11 // pred_fallthru
        _
      // Predicated region
      $region41: #{conv1d_speech_forward.1} parent=11 // pred_check
        %p293 = pneg %p210
      $region42: #{conv1d_speech_forward.1} parent=11 // pred_check_branch
        %295 = sbr.rel (%p293) target = $region44
      $region43: #{conv1d_speech_forward.1} parent=11 // pred_region
        _
      $region44: #{conv1d_speech_forward.1} parent=11 // pred_fallthru
        _
      // Predicated region
      $region45: #{conv1d_speech_forward.1} parent=11 // pred_check
        %p296 = pneg %p231
      $region46: #{conv1d_speech_forward.1} parent=11 // pred_check_branch
        %298 = sbr.rel (%p296) target = $region48
      $region47: #{conv1d_speech_forward.1} parent=11 // pred_region
        _
      $region48: #{conv1d_speech_forward.1} parent=11 // pred_fallthru
        _
    $region12: #{conv1d_speech_forward.1} parent=5 // pred_fallthru
      _
    %p299 = scmp.lt.s32.totalorder %s16, 2
    // Predicated region
    $region49: #{conv1d_speech_forward.1} parent=5 // pred_check
      %p300 = pneg %p299
    $region50: #{conv1d_speech_forward.1} parent=5 // pred_check_branch
      %302 = sbr.rel (%p300) target = $region52
    $region51: #{conv1d_speech_forward.1} parent=5 // pred_region
      // Predicated region
      $region53: #{conv1d_speech_forward.1} parent=51 // pred_check
        %p303 = pneg %p36
      $region54: #{conv1d_speech_forward.1} parent=51 // pred_check_branch
        %305 = sbr.rel (%p303) target = $region56
      $region55: #{conv1d_speech_forward.1} parent=51 // pred_region
        %p306 = scmp.lt.s32.totalorder %s16, 1
        %s307 = scalar_select %p306, %s16, 1
        %s308 = smul.addr %s307, 5
        %s309 = smul.addr %s308, 4
        %s310 = scalar_lea.vmem %s0, %s309
      $region56: #{conv1d_speech_forward.1} parent=51 // pred_fallthru
        _
    $region52: #{conv1d_speech_forward.1} parent=5 // pred_fallthru
      _
    %p311 = scmp.le.s32.totalorder 1, %s16
    %p312 = scmp.lt.s32.totalorder %s16, 3
    %p313 = pnand %p311, %p312
    %p314 = pneg %p313
    // Predicated region
    $region57: #{conv1d_speech_forward.1} parent=5 // pred_check
      _
    $region58: #{conv1d_speech_forward.1} parent=5 // pred_check_branch
      %316 = sbr.rel (%p313) target = $region60
    $region59: #{conv1d_speech_forward.1} parent=5 // pred_region
      %s317 = ssub.s32 %s16, 1
      %p318 = scmp.lt.s32.totalorder %s21, 1
      %s319 = scalar_select %p318, %s21, 1
      %s320 = smul.addr %s319, 5
      %s321 = smul.addr %s320, 4
      %s322 = scalar_lea.vmem %s0, %s321
      %p323 = pneg %p42
      %p324 = pneg %p39
      %p325 = pneg %p63
      %p326 = pneg %p60
      %p327 = pneg %p84
      %p328 = pneg %p81
      %p329 = pneg %p105
      %p330 = pneg %p102
      %p331 = pneg %p126
      %p332 = pneg %p123
      %p333 = pneg %p147
      %p334 = pneg %p144
      %p335 = pneg %p168
      %p336 = pneg %p165
      %p337 = pneg %p189
      %p338 = pneg %p186
      %p339 = pneg %p210
      %p340 = pneg %p207
      %p341 = pneg %p231
      %p342 = pneg %p228
      %p343 = pneg %p257
      %p344 = pneg %p254
      %p345 = scmp.lt.s32.totalorder %s21, 1
      %s346 = scalar_select %p345, %s21, 1
      %s347 = smul.addr %s346, 2
      %s348 = smul.addr %s347, 8
      %s349 = scalar_lea.vmem %s10, %s348
      %p350 = scmp.lt.s32.totalorder %s21, 1
      %s351 = scalar_select %p350, %s21, 1
      %s352 = smul.addr %s351, 5
      %s353 = smul.addr %s352, 4
      %s354 = scalar_lea.vmem %s0, %s353
      %p355 = scmp.lt.s32.totalorder %s21, 1
      %s356 = scalar_select %p355, %s21, 1
      %s357 = smul.addr %s356, 2
      %s358 = smul.addr %s357, 8
      %s359 = scalar_lea.vmem %s10, %s358
      %v361 = vld [vmem:[%s354] sm:$0xff]
      %v362 = vld [vmem:[%s354 + $0x8] sm:$0xff]
      %v363 = vld [vmem:[%s354 + $0x10] sm:$0xf]
      %v366 = vunpack.c.l.b16 %v361
      %v367 = vunpack.c.h.b16 %v361
      %v368 = vunpack.c.l.b16 %v362
      %v369 = vunpack.c.h.b16 %v362
      %v370 = vpack.c.b16 %v366, %v366
      %v371 = vpack.c.b16 %v367, %v367
      %v372 = vpack.c.b16 %v368, %v368
      %v373 = vpack.c.b16 %v369, %v369
      %v375 = vunpack.c.l.b16 %v363
      %v376 = vpack.c.b16 %v375, %v375
      %377 = vrot.lane.b32.xlu0 %v370, 120
      %v378 = vpop.permute.xlu0 %377
      %379 = vrot.lane.b32.xlu0 %v371, 120
      %v380 = vpop.permute.xlu0 %379
      %381 = vrot.lane.b32.xlu0 %v372, 120
      %v382 = vpop.permute.xlu0 %381
      %383 = vrot.lane.b32.xlu0 %v373, 120
      %v384 = vpop.permute.xlu0 %383
      %385 = vrot.lane.b32.xlu0 %v376, 120
      %v386 = vpop.permute.xlu0 %385
      %vm387 = vcmask 982016
      %v388 = vsel %vm387, %v378, %v380
      %v389 = vsel %vm387, %v380, %v382
      %v390 = vsel %vm387, %v382, %v384
      %v391 = vsel %vm387, %v384, %v386
      %vm392 = vcmask 1043456
      %v395 = vsel %vm392, %v370, %v388
      %v398 = vsel %vm392, %v371, %v389
      %v401 = vsel %vm392, %v372, %v390
      %v404 = vsel %vm392, %v373, %v391
      %v405 = vld [vmem:[%s1] sm:$0xf]
      %v406 = vld [vmem:[%s1 + $0x4] sm:$0xf]
      %v407 = vld [vmem:[%s2] sm:$0xff]
      %v408 = vld [vmem:[%s2 + $0x8] sm:$0xff]
      %410 = vset.pattern.permute.xlu0 0
      %411 = vperm.xlu0 %410, %v407
      %v412 = vpop.permute.xlu0 %411
      %415 = vset.pattern.permute.xlu0 0
      %416 = vperm.xlu0 %415, %v408
      %v417 = vpop.permute.xlu0 %416
      %v421 = vunpack.c.l.b16 %v405
      %v422 = vunpack.c.l.b16 %v406
      %v423 = vpack.c.b16 %v422, %v421
      %vm424 = vcmask 80896
      %v426 = vsel %vm424, %v423, 0
      %vm428 = vcmask 1044480
      %v429 = vsel %vm428, %v395, 0
      %v431 = vsel %vm428, %v398, 0
      %v433 = vsel %vm428, %v401, 0
      %v435 = vsel %vm428, %v404, 0
      %437 = vmatprep.subr.bf16.mxu0 0
      %438 = vmatpush1.bf16.msra.mxu0 0
      %439 = vmatprep.subr.bf16.mxu0 0
      %440 = vmatpush1.bf16.msra.mxu0 0
      %441 = vmatprep.subr.bf16.mxu0 0
      %442 = vmatpush1.bf16.msra.mxu0 0
      %443 = vmatprep.subr.bf16.mxu0 0
      %444 = vmatpush1.bf16.msra.mxu0 0
      %445 = vmatprep.subr.bf16.mxu0 0
      %446 = vmatpush1.bf16.msra.mxu0 0
      %447 = vmatprep.subr.bf16.mxu0 0
      %448 = vmatpush1.bf16.msra.mxu0 0
      %449 = vmatprep.subr.bf16.mxu0 0
      %450 = vmatpush1.bf16.msra.mxu0 0
      %451 = vmatprep.subr.bf16.mxu0 %v431
      %452 = vmatpush1.bf16.msra.mxu0 %v429
      %453 = vmatprep.subr.bf16.mxu0 0
      %454 = vmatpush2.bf16.msra.mxu0 0
      %455 = vmatprep.subr.bf16.mxu0 0
      %456 = vmatpush2.bf16.msra.mxu0 0
      %457 = vmatprep.subr.bf16.mxu0 0
      %458 = vmatpush2.bf16.msra.mxu0 0
      %459 = vmatprep.subr.bf16.mxu0 0
      %460 = vmatpush2.bf16.msra.mxu0 0
      %461 = vmatprep.subr.bf16.mxu0 0
      %462 = vmatpush2.bf16.msra.mxu0 0
      %463 = vmatprep.subr.bf16.mxu0 0
      %464 = vmatpush2.bf16.msra.mxu0 0
      %465 = vmatprep.subr.bf16.mxu0 0
      %466 = vmatpush2.bf16.msra.mxu0 0
      %467 = vmatprep.subr.bf16.mxu0 0
      %468 = vmatpush2.bf16.msra.mxu0 0
      %469 = vmatprep.mubr.bf16.mxu0 0
      %470 = vmatmul.mubr.bf16.gmra.mxu0 %v426
      %v471 = vpop.f32.mrf.mxu0
      %v472 = vadd.f32 %v412, %v471
      %v473 = vpop.f32.mrf.mxu0
      %v474 = vadd.f32 %v412, %v473
      %v475 = vpop.f32.mrf.mxu0
      %v476 = vadd.f32 %v417, %v475
      %v477 = vpop.f32.mrf.mxu0
      %v478 = vadd.f32 %v417, %v477
      %479 = vdwg.mxu0
      %480 = vmatprep.subr.bf16.mxu0 0
      %481 = vmatpush1.bf16.msra.mxu0 0
      %482 = vmatprep.subr.bf16.mxu0 0
      %483 = vmatpush1.bf16.msra.mxu0 0
      %484 = vmatprep.subr.bf16.mxu0 0
      %485 = vmatpush1.bf16.msra.mxu0 0
      %486 = vmatprep.subr.bf16.mxu0 0
      %487 = vmatpush1.bf16.msra.mxu0 0
      %488 = vmatprep.subr.bf16.mxu0 0
      %489 = vmatpush1.bf16.msra.mxu0 0
      %490 = vmatprep.subr.bf16.mxu0 0
      %491 = vmatpush1.bf16.msra.mxu0 0
      %492 = vmatprep.subr.bf16.mxu0 0
      %493 = vmatpush1.bf16.msra.mxu0 0
      %494 = vmatprep.subr.bf16.mxu0 %v435
      %495 = vmatpush1.bf16.msra.mxu0 %v433
      %496 = vmatprep.subr.bf16.mxu0 0
      %497 = vmatpush2.bf16.msra.mxu0 0
      %498 = vmatprep.subr.bf16.mxu0 0
      %499 = vmatpush2.bf16.msra.mxu0 0
      %500 = vmatprep.subr.bf16.mxu0 0
      %501 = vmatpush2.bf16.msra.mxu0 0
      %502 = vmatprep.subr.bf16.mxu0 0
      %503 = vmatpush2.bf16.msra.mxu0 0
      %504 = vmatprep.subr.bf16.mxu0 0
      %505 = vmatpush2.bf16.msra.mxu0 0
      %506 = vmatprep.subr.bf16.mxu0 0
      %507 = vmatpush2.bf16.msra.mxu0 0
      %508 = vmatprep.subr.bf16.mxu0 0
      %509 = vmatpush2.bf16.msra.mxu0 0
      %510 = vmatprep.subr.bf16.mxu0 0
      %511 = vmatpush2.bf16.msra.mxu0 0
      %512 = vmatprep.mubr.bf16.mxu0 0
      %513 = vmatmul.mubr.bf16.gmra.mxu0 %v426
      %v514 = vpop.f32.mrf.mxu0
      %v515 = vadd.f32 %v412, %v514
      %v516 = vpop.f32.mrf.mxu0
      %v517 = vadd.f32 %v412, %v516
      %v518 = vpop.f32.mrf.mxu0
      %v519 = vadd.f32 %v417, %v518
      %v520 = vpop.f32.mrf.mxu0
      %v521 = vadd.f32 %v417, %v520
      %522 = vdwg.mxu0
      %v523 = vmax.f32 %v472, 0.0
      %v524 = vmax.f32 %v474, 0.0
      %v525 = vmax.f32 %v515, 0.0
      %v526 = vmax.f32 %v517, 0.0
      %v527 = vmax.f32 %v476, 0.0
      %v528 = vmax.f32 %v478, 0.0
      %v529 = vmax.f32 %v519, 0.0
      %v530 = vmax.f32 %v521, 0.0
      %v531 = vrot.slane %v370, 1
      %v532 = vrot.slane %v371, 1
      %v533 = vrot.slane %v372, 1
      %v534 = vrot.slane %v373, 1
      %v535 = vrot.slane %v370, 5
      %v536 = vrot.slane %v371, 5
      %v537 = vrot.slane %v372, 5
      %v538 = vrot.slane %v373, 5
      %v539 = vrot.slane %v376, 5
      %540 = vrot.lane.b32.xlu0 %v535, 120
      %v541 = vpop.permute.xlu0 %540
      %542 = vrot.lane.b32.xlu0 %v536, 120
      %v543 = vpop.permute.xlu0 %542
      %544 = vrot.lane.b32.xlu0 %v537, 120
      %v545 = vpop.permute.xlu0 %544
      %546 = vrot.lane.b32.xlu0 %v538, 120
      %v547 = vpop.permute.xlu0 %546
      %548 = vrot.lane.b32.xlu0 %v539, 120
      %v549 = vpop.permute.xlu0 %548
      %v550 = vsel %vm387, %v541, %v543
      %v551 = vsel %vm387, %v543, %v545
      %v552 = vsel %vm387, %v545, %v547
      %v553 = vsel %vm387, %v547, %v549
      %vm554 = vcmask 1042432
      %v557 = vsel %vm554, %v531, %v550
      %v560 = vsel %vm554, %v532, %v551
      %v563 = vsel %vm554, %v533, %v552
      %v566 = vsel %vm554, %v534, %v553
      %v567 = vsel %vm428, %v557, 0
      %v569 = vsel %vm428, %v560, 0
      %v571 = vsel %vm428, %v563, 0
      %v573 = vsel %vm428, %v566, 0
      %575 = vmatprep.subr.bf16.mxu0 0
      %576 = vmatpush1.bf16.msra.mxu0 0
      %577 = vmatprep.subr.bf16.mxu0 0
      %578 = vmatpush1.bf16.msra.mxu0 0
      %579 = vmatprep.subr.bf16.mxu0 0
      %580 = vmatpush1.bf16.msra.mxu0 0
      %581 = vmatprep.subr.bf16.mxu0 0
      %582 = vmatpush1.bf16.msra.mxu0 0
      %583 = vmatprep.subr.bf16.mxu0 0
      %584 = vmatpush1.bf16.msra.mxu0 0
      %585 = vmatprep.subr.bf16.mxu0 0
      %586 = vmatpush1.bf16.msra.mxu0 0
      %587 = vmatprep.subr.bf16.mxu0 0
      %588 = vmatpush1.bf16.msra.mxu0 0
      %589 = vmatprep.subr.bf16.mxu0 %v569
      %590 = vmatpush1.bf16.msra.mxu0 %v567
      %591 = vmatprep.subr.bf16.mxu0 0
      %592 = vmatpush2.bf16.msra.mxu0 0
      %593 = vmatprep.subr.bf16.mxu0 0
      %594 = vmatpush2.bf16.msra.mxu0 0
      %595 = vmatprep.subr.bf16.mxu0 0
      %596 = vmatpush2.bf16.msra.mxu0 0
      %597 = vmatprep.subr.bf16.mxu0 0
      %598 = vmatpush2.bf16.msra.mxu0 0
      %599 = vmatprep.subr.bf16.mxu0 0
      %600 = vmatpush2.bf16.msra.mxu0 0
      %601 = vmatprep.subr.bf16.mxu0 0
      %602 = vmatpush2.bf16.msra.mxu0 0
      %603 = vmatprep.subr.bf16.mxu0 0
      %604 = vmatpush2.bf16.msra.mxu0 0
      %605 = vmatprep.subr.bf16.mxu0 0
      %606 = vmatpush2.bf16.msra.mxu0 0
      %607 = vmatprep.mubr.bf16.mxu0 0
      %608 = vmatmul.mubr.bf16.gmra.mxu0 %v426
      %v609 = vpop.f32.mrf.mxu0
      %v610 = vadd.f32 %v412, %v609
      %v611 = vpop.f32.mrf.mxu0
      %v612 = vadd.f32 %v412, %v611
      %v613 = vpop.f32.mrf.mxu0
      %v614 = vadd.f32 %v417, %v613
      %v615 = vpop.f32.mrf.mxu0
      %v616 = vadd.f32 %v417, %v615
      %617 = vdwg.mxu0
      %618 = vmatprep.subr.bf16.mxu0 0
      %619 = vmatpush1.bf16.msra.mxu0 0
      %620 = vmatprep.subr.bf16.mxu0 0
      %621 = vmatpush1.bf16.msra.mxu0 0
      %622 = vmatprep.subr.bf16.mxu0 0
      %623 = vmatpush1.bf16.msra.mxu0 0
      %624 = vmatprep.subr.bf16.mxu0 0
      %625 = vmatpush1.bf16.msra.mxu0 0
      %626 = vmatprep.subr.bf16.mxu0 0
      %627 = vmatpush1.bf16.msra.mxu0 0
      %628 = vmatprep.subr.bf16.mxu0 0
      %629 = vmatpush1.bf16.msra.mxu0 0
      %630 = vmatprep.subr.bf16.mxu0 0
      %631 = vmatpush1.bf16.msra.mxu0 0
      %632 = vmatprep.subr.bf16.mxu0 %v573
      %633 = vmatpush1.bf16.msra.mxu0 %v571
      %634 = vmatprep.subr.bf16.mxu0 0
      %635 = vmatpush2.bf16.msra.mxu0 0
      %636 = vmatprep.subr.bf16.mxu0 0
      %637 = vmatpush2.bf16.msra.mxu0 0
      %638 = vmatprep.subr.bf16.mxu0 0
      %639 = vmatpush2.bf16.msra.mxu0 0
      %640 = vmatprep.subr.bf16.mxu0 0
      %641 = vmatpush2.bf16.msra.mxu0 0
      %642 = vmatprep.subr.bf16.mxu0 0
      %643 = vmatpush2.bf16.msra.mxu0 0
      %644 = vmatprep.subr.bf16.mxu0 0
      %645 = vmatpush2.bf16.msra.mxu0 0
      %646 = vmatprep.subr.bf16.mxu0 0
      %647 = vmatpush2.bf16.msra.mxu0 0
      %648 = vmatprep.subr.bf16.mxu0 0
      %649 = vmatpush2.bf16.msra.mxu0 0
      %650 = vmatprep.mubr.bf16.mxu0 0
      %651 = vmatmul.mubr.bf16.gmra.mxu0 %v426
      %v652 = vpop.f32.mrf.mxu0
      %v653 = vadd.f32 %v412, %v652
      %v654 = vpop.f32.mrf.mxu0
      %v655 = vadd.f32 %v412, %v654
      %v656 = vpop.f32.mrf.mxu0
      %v657 = vadd.f32 %v417, %v656
      %v658 = vpop.f32.mrf.mxu0
      %v659 = vadd.f32 %v417, %v658
      %660 = vdwg.mxu0
      %v661 = vmax.f32 %v610, 0.0
      %v662 = vmax.f32 %v612, 0.0
      %v663 = vmax.f32 %v653, 0.0
      %v664 = vmax.f32 %v655, 0.0
      %v665 = vmax.f32 %v614, 0.0
      %v666 = vmax.f32 %v616, 0.0
      %v667 = vmax.f32 %v657, 0.0
      %v668 = vmax.f32 %v659, 0.0
      %v669 = vrot.slane %v370, 2
      %v670 = vrot.slane %v371, 2
      %v671 = vrot.slane %v372, 2
      %v672 = vrot.slane %v373, 2
      %v673 = vrot.slane %v370, 6
      %v674 = vrot.slane %v371, 6
      %v675 = vrot.slane %v372, 6
      %v676 = vrot.slane %v373, 6
      %v677 = vrot.slane %v376, 6
      %678 = vrot.lane.b32.xlu0 %v673, 120
      %v679 = vpop.permute.xlu0 %678
      %680 = vrot.lane.b32.xlu0 %v674, 120
      %v681 = vpop.permute.xlu0 %680
      %682 = vrot.lane.b32.xlu0 %v675, 120
      %v683 = vpop.permute.xlu0 %682
      %684 = vrot.lane.b32.xlu0 %v676, 120
      %v685 = vpop.permute.xlu0 %684
      %686 = vrot.lane.b32.xlu0 %v677, 120
      %v687 = vpop.permute.xlu0 %686
      %v688 = vsel %vm387, %v679, %v681
      %v689 = vsel %vm387, %v681, %v683
      %v690 = vsel %vm387, %v683, %v685
      %v691 = vsel %vm387, %v685, %v687
      %vm692 = vcmask 1041408
      %v695 = vsel %vm692, %v669, %v688
      %v698 = vsel %vm692, %v670, %v689
      %v701 = vsel %vm692, %v671, %v690
      %v704 = vsel %vm692, %v672, %v691
      %v705 = vsel %vm428, %v695, 0
      %v707 = vsel %vm428, %v698, 0
      %v709 = vsel %vm428, %v701, 0
      %v711 = vsel %vm428, %v704, 0
      %713 = vmatprep.subr.bf16.mxu0 0
      %714 = vmatpush1.bf16.msra.mxu0 0
      %715 = vmatprep.subr.bf16.mxu0 0
      %716 = vmatpush1.bf16.msra.mxu0 0
      %717 = vmatprep.subr.bf16.mxu0 0
      %718 = vmatpush1.bf16.msra.mxu0 0
      %719 = vmatprep.subr.bf16.mxu0 0
      %720 = vmatpush1.bf16.msra.mxu0 0
      %721 = vmatprep.subr.bf16.mxu0 0
      %722 = vmatpush1.bf16.msra.mxu0 0
      %723 = vmatprep.subr.bf16.mxu0 0
      %724 = vmatpush1.bf16.msra.mxu0 0
      %725 = vmatprep.subr.bf16.mxu0 0
      %726 = vmatpush1.bf16.msra.mxu0 0
      %727 = vmatprep.subr.bf16.mxu0 %v707
      %728 = vmatpush1.bf16.msra.mxu0 %v705
      %729 = vmatprep.subr.bf16.mxu0 0
      %730 = vmatpush2.bf16.msra.mxu0 0
      %731 = vmatprep.subr.bf16.mxu0 0
      %732 = vmatpush2.bf16.msra.mxu0 0
      %733 = vmatprep.subr.bf16.mxu0 0
      %734 = vmatpush2.bf16.msra.mxu0 0
      %735 = vmatprep.subr.bf16.mxu0 0
      %736 = vmatpush2.bf16.msra.mxu0 0
      %737 = vmatprep.subr.bf16.mxu0 0
      %738 = vmatpush2.bf16.msra.mxu0 0
      %739 = vmatprep.subr.bf16.mxu0 0
      %740 = vmatpush2.bf16.msra.mxu0 0
      %741 = vmatprep.subr.bf16.mxu0 0
      %742 = vmatpush2.bf16.msra.mxu0 0
      %743 = vmatprep.subr.bf16.mxu0 0
      %744 = vmatpush2.bf16.msra.mxu0 0
      %745 = vmatprep.mubr.bf16.mxu0 0
      %746 = vmatmul.mubr.bf16.gmra.mxu0 %v426
      %v747 = vpop.f32.mrf.mxu0
      %v748 = vadd.f32 %v412, %v747
      %v749 = vpop.f32.mrf.mxu0
      %v750 = vadd.f32 %v412, %v749
      %v751 = vpop.f32.mrf.mxu0
      %v752 = vadd.f32 %v417, %v751
      %v753 = vpop.f32.mrf.mxu0
      %v754 = vadd.f32 %v417, %v753
      %755 = vdwg.mxu0
      %756 = vmatprep.subr.bf16.mxu0 0
      %757 = vmatpush1.bf16.msra.mxu0 0
      %758 = vmatprep.subr.bf16.mxu0 0
      %759 = vmatpush1.bf16.msra.mxu0 0
      %760 = vmatprep.subr.bf16.mxu0 0
      %761 = vmatpush1.bf16.msra.mxu0 0
      %762 = vmatprep.subr.bf16.mxu0 0
      %763 = vmatpush1.bf16.msra.mxu0 0
      %764 = vmatprep.subr.bf16.mxu0 0
      %765 = vmatpush1.bf16.msra.mxu0 0
      %766 = vmatprep.subr.bf16.mxu0 0
      %767 = vmatpush1.bf16.msra.mxu0 0
      %768 = vmatprep.subr.bf16.mxu0 0
      %769 = vmatpush1.bf16.msra.mxu0 0
      %770 = vmatprep.subr.bf16.mxu0 %v711
      %771 = vmatpush1.bf16.msra.mxu0 %v709
      %772 = vmatprep.subr.bf16.mxu0 0
      %773 = vmatpush2.bf16.msra.mxu0 0
      %774 = vmatprep.subr.bf16.mxu0 0
      %775 = vmatpush2.bf16.msra.mxu0 0
      %776 = vmatprep.subr.bf16.mxu0 0
      %777 = vmatpush2.bf16.msra.mxu0 0
      %778 = vmatprep.subr.bf16.mxu0 0
      %779 = vmatpush2.bf16.msra.mxu0 0
      %780 = vmatprep.subr.bf16.mxu0 0
      %781 = vmatpush2.bf16.msra.mxu0 0
      %782 = vmatprep.subr.bf16.mxu0 0
      %783 = vmatpush2.bf16.msra.mxu0 0
      %784 = vmatprep.subr.bf16.mxu0 0
      %785 = vmatpush2.bf16.msra.mxu0 0
      %786 = vmatprep.subr.bf16.mxu0 0
      %787 = vmatpush2.bf16.msra.mxu0 0
      %788 = vmatprep.mubr.bf16.mxu0 0
      %789 = vmatmul.mubr.bf16.gmra.mxu0 %v426
      %v790 = vpop.f32.mrf.mxu0
      %v791 = vadd.f32 %v412, %v790
      %v792 = vpop.f32.mrf.mxu0
      %v793 = vadd.f32 %v412, %v792
      %v794 = vpop.f32.mrf.mxu0
      %v795 = vadd.f32 %v417, %v794
      %v796 = vpop.f32.mrf.mxu0
      %v797 = vadd.f32 %v417, %v796
      %798 = vdwg.mxu0
      %v799 = vmax.f32 %v748, 0.0
      %v800 = vmax.f32 %v750, 0.0
      %v801 = vmax.f32 %v791, 0.0
      %v802 = vmax.f32 %v793, 0.0
      %v803 = vmax.f32 %v752, 0.0
      %v804 = vmax.f32 %v754, 0.0
      %v805 = vmax.f32 %v795, 0.0
      %v806 = vmax.f32 %v797, 0.0
      %v807 = vrot.slane %v370, 3
      %v808 = vrot.slane %v371, 3
      %v809 = vrot.slane %v372, 3
      %v810 = vrot.slane %v373, 3
      %v811 = vrot.slane %v370, 7
      %v812 = vrot.slane %v371, 7
      %v813 = vrot.slane %v372, 7
      %v814 = vrot.slane %v373, 7
      %v815 = vrot.slane %v376, 7
      %816 = vrot.lane.b32.xlu0 %v811, 120
      %v817 = vpop.permute.xlu0 %816
      %818 = vrot.lane.b32.xlu0 %v812, 120
      %v819 = vpop.permute.xlu0 %818
      %820 = vrot.lane.b32.xlu0 %v813, 120
      %v821 = vpop.permute.xlu0 %820
      %822 = vrot.lane.b32.xlu0 %v814, 120
      %v823 = vpop.permute.xlu0 %822
      %824 = vrot.lane.b32.xlu0 %v815, 120
      %v825 = vpop.permute.xlu0 %824
      %v826 = vsel %vm387, %v817, %v819
      %v827 = vsel %vm387, %v819, %v821
      %v828 = vsel %vm387, %v821, %v823
      %v829 = vsel %vm387, %v823, %v825
      %vm830 = vcmask 1040384
      %v833 = vsel %vm830, %v807, %v826
      %v836 = vsel %vm830, %v808, %v827
      %v839 = vsel %vm830, %v809, %v828
      %v842 = vsel %vm830, %v810, %v829
      %v843 = vsel %vm428, %v833, 0
      %v845 = vsel %vm428, %v836, 0
      %v847 = vsel %vm428, %v839, 0
      %v849 = vsel %vm428, %v842, 0
      %851 = vmatprep.subr.bf16.mxu0 0
      %852 = vmatpush1.bf16.msra.mxu0 0
      %853 = vmatprep.subr.bf16.mxu0 0
      %854 = vmatpush1.bf16.msra.mxu0 0
      %855 = vmatprep.subr.bf16.mxu0 0
      %856 = vmatpush1.bf16.msra.mxu0 0
      %857 = vmatprep.subr.bf16.mxu0 0
      %858 = vmatpush1.bf16.msra.mxu0 0
      %859 = vmatprep.subr.bf16.mxu0 0
      %860 = vmatpush1.bf16.msra.mxu0 0
      %861 = vmatprep.subr.bf16.mxu0 0
      %862 = vmatpush1.bf16.msra.mxu0 0
      %863 = vmatprep.subr.bf16.mxu0 0
      %864 = vmatpush1.bf16.msra.mxu0 0
      %865 = vmatprep.subr.bf16.mxu0 %v845
      %866 = vmatpush1.bf16.msra.mxu0 %v843
      %867 = vmatprep.subr.bf16.mxu0 0
      %868 = vmatpush2.bf16.msra.mxu0 0
      %869 = vmatprep.subr.bf16.mxu0 0
      %870 = vmatpush2.bf16.msra.mxu0 0
      %871 = vmatprep.subr.bf16.mxu0 0
      %872 = vmatpush2.bf16.msra.mxu0 0
      %873 = vmatprep.subr.bf16.mxu0 0
      %874 = vmatpush2.bf16.msra.mxu0 0
      %875 = vmatprep.subr.bf16.mxu0 0
      %876 = vmatpush2.bf16.msra.mxu0 0
      %877 = vmatprep.subr.bf16.mxu0 0
      %878 = vmatpush2.bf16.msra.mxu0 0
      %879 = vmatprep.subr.bf16.mxu0 0
      %880 = vmatpush2.bf16.msra.mxu0 0
      %881 = vmatprep.subr.bf16.mxu0 0
      %882 = vmatpush2.bf16.msra.mxu0 0
      %883 = vmatprep.mubr.bf16.mxu0 0
      %884 = vmatmul.mubr.bf16.gmra.mxu0 %v426
      %v885 = vpop.f32.mrf.mxu0
      %v886 = vadd.f32 %v412, %v885
      %v887 = vpop.f32.mrf.mxu0
      %v888 = vadd.f32 %v412, %v887
      %v889 = vpop.f32.mrf.mxu0
      %v890 = vadd.f32 %v417, %v889
      %v891 = vpop.f32.mrf.mxu0
      %v892 = vadd.f32 %v417, %v891
      %893 = vdwg.mxu0
      %894 = vmatprep.subr.bf16.mxu0 0
      %895 = vmatpush1.bf16.msra.mxu0 0
      %896 = vmatprep.subr.bf16.mxu0 0
      %897 = vmatpush1.bf16.msra.mxu0 0
      %898 = vmatprep.subr.bf16.mxu0 0
      %899 = vmatpush1.bf16.msra.mxu0 0
      %900 = vmatprep.subr.bf16.mxu0 0
      %901 = vmatpush1.bf16.msra.mxu0 0
      %902 = vmatprep.subr.bf16.mxu0 0
      %903 = vmatpush1.bf16.msra.mxu0 0
      %904 = vmatprep.subr.bf16.mxu0 0
      %905 = vmatpush1.bf16.msra.mxu0 0
      %906 = vmatprep.subr.bf16.mxu0 0
      %907 = vmatpush1.bf16.msra.mxu0 0
      %908 = vmatprep.subr.bf16.mxu0 %v849
      %909 = vmatpush1.bf16.msra.mxu0 %v847
      %910 = vmatprep.subr.bf16.mxu0 0
      %911 = vmatpush2.bf16.msra.mxu0 0
      %912 = vmatprep.subr.bf16.mxu0 0
      %913 = vmatpush2.bf16.msra.mxu0 0
      %914 = vmatprep.subr.bf16.mxu0 0
      %915 = vmatpush2.bf16.msra.mxu0 0
      %916 = vmatprep.subr.bf16.mxu0 0
      %917 = vmatpush2.bf16.msra.mxu0 0
      %918 = vmatprep.subr.bf16.mxu0 0
      %919 = vmatpush2.bf16.msra.mxu0 0
      %920 = vmatprep.subr.bf16.mxu0 0
      %921 = vmatpush2.bf16.msra.mxu0 0
      %922 = vmatprep.subr.bf16.mxu0 0
      %923 = vmatpush2.bf16.msra.mxu0 0
      %924 = vmatprep.subr.bf16.mxu0 0
      %925 = vmatpush2.bf16.msra.mxu0 0
      %926 = vmatprep.mubr.bf16.mxu0 0
      %927 = vmatmul.mubr.bf16.gmra.mxu0 %v426
      %v928 = vpop.f32.mrf.mxu0
      %v929 = vadd.f32 %v412, %v928
      %v930 = vpop.f32.mrf.mxu0
      %v931 = vadd.f32 %v412, %v930
      %v932 = vpop.f32.mrf.mxu0
      %v933 = vadd.f32 %v417, %v932
      %v934 = vpop.f32.mrf.mxu0
      %v935 = vadd.f32 %v417, %v934
      %936 = vdwg.mxu0
      %v937 = vmax.f32 %v886, 0.0
      %v938 = vmax.f32 %v888, 0.0
      %v939 = vmax.f32 %v929, 0.0
      %v940 = vmax.f32 %v931, 0.0
      %v941 = vmax.f32 %v890, 0.0
      %v942 = vmax.f32 %v892, 0.0
      %v943 = vmax.f32 %v933, 0.0
      %v944 = vmax.f32 %v935, 0.0
      %v945 = vpack.c.bf16 %v527, %v523
      %v946 = vpack.c.bf16 %v528, %v524
      %v947 = vpack.c.bf16 %v529, %v525
      %v948 = vpack.c.bf16 %v530, %v526
      %v949 = vpack.c.bf16 %v665, %v661
      %v950 = vpack.c.bf16 %v666, %v662
      %v951 = vpack.c.bf16 %v667, %v663
      %v952 = vpack.c.bf16 %v668, %v664
      %v953 = vpack.c.bf16 %v803, %v799
      %v954 = vpack.c.bf16 %v804, %v800
      %v955 = vpack.c.bf16 %v805, %v801
      %v956 = vpack.c.bf16 %v806, %v802
      %v957 = vpack.c.bf16 %v941, %v937
      %v958 = vpack.c.bf16 %v942, %v938
      %v959 = vpack.c.bf16 %v943, %v939
      %v960 = vpack.c.bf16 %v944, %v940
      %977 = vrot.lane.b32.xlu0 %v945, 8
      %v978 = vpop.permute.xlu0 %977
      %979 = vrot.lane.b32.xlu0 %v946, 8
      %v980 = vpop.permute.xlu0 %979
      %981 = vrot.lane.b32.xlu0 %v947, 8
      %v982 = vpop.permute.xlu0 %981
      %983 = vrot.lane.b32.xlu0 %v948, 8
      %v984 = vpop.permute.xlu0 %983
      %985 = vrot.lane.b32.xlu0 %v949, 8
      %v986 = vpop.permute.xlu0 %985
      %987 = vrot.lane.b32.xlu0 %v950, 8
      %v988 = vpop.permute.xlu0 %987
      %989 = vrot.lane.b32.xlu0 %v951, 8
      %v990 = vpop.permute.xlu0 %989
      %991 = vrot.lane.b32.xlu0 %v952, 8
      %v992 = vpop.permute.xlu0 %991
      %993 = vrot.lane.b32.xlu0 %v953, 8
      %v994 = vpop.permute.xlu0 %993
      %995 = vrot.lane.b32.xlu0 %v954, 8
      %v996 = vpop.permute.xlu0 %995
      %997 = vrot.lane.b32.xlu0 %v955, 8
      %v998 = vpop.permute.xlu0 %997
      %999 = vrot.lane.b32.xlu0 %v956, 8
      %v1000 = vpop.permute.xlu0 %999
      %1001 = vrot.lane.b32.xlu0 %v957, 8
      %v1002 = vpop.permute.xlu0 %1001
      %1003 = vrot.lane.b32.xlu0 %v958, 8
      %v1004 = vpop.permute.xlu0 %1003
      %1005 = vrot.lane.b32.xlu0 %v959, 8
      %v1006 = vpop.permute.xlu0 %1005
      %1007 = vrot.lane.b32.xlu0 %v960, 8
      %v1008 = vpop.permute.xlu0 %1007
      %vm1009 = vcmask 64512
      %v1010 = vsel %vm1009, %v978, %v980
      %v1011 = vsel %vm1009, %v980, %v982
      %v1012 = vsel %vm1009, %v982, %v984
      %v1013 = vsel %vm1009, %v986, %v988
      %v1014 = vsel %vm1009, %v988, %v990
      %v1015 = vsel %vm1009, %v990, %v992
      %v1016 = vsel %vm1009, %v994, %v996
      %v1017 = vsel %vm1009, %v996, %v998
      %v1018 = vsel %vm1009, %v998, %v1000
      %v1019 = vsel %vm1009, %v1002, %v1004
      %v1020 = vsel %vm1009, %v1004, %v1006
      %v1021 = vsel %vm1009, %v1006, %v1008
      %vm1034 = vcmask 64512
      %v1037 = vsel %vm1034, 0, %v978
      %v1040 = vsel %vm1034, 0, %v986
      %v1043 = vsel %vm1034, 0, %v994
      %v1046 = vsel %vm1034, 0, %v1002
      %v1049 = vsel %vm1034, %v984, 0
      %v1051 = vsel %vm1034, %v992, 0
      %v1053 = vsel %vm1034, %v1000, 0
      %v1055 = vsel %vm1034, %v1008, 0
      %1064 = vrot.lane.b32.xlu0 %v1037, 120
      %v1065 = vpop.permute.xlu0 %1064
      %1066 = vrot.lane.b32.xlu0 %v1010, 120
      %v1067 = vpop.permute.xlu0 %1066
      %1068 = vrot.lane.b32.xlu0 %v1011, 120
      %v1069 = vpop.permute.xlu0 %1068
      %1070 = vrot.lane.b32.xlu0 %v1012, 120
      %v1071 = vpop.permute.xlu0 %1070
      %1072 = vrot.lane.b32.xlu0 %v1049, 120
      %v1073 = vpop.permute.xlu0 %1072
      %1074 = vrot.lane.b32.xlu0 %v1040, 120
      %v1075 = vpop.permute.xlu0 %1074
      %1076 = vrot.lane.b32.xlu0 %v1013, 120
      %v1077 = vpop.permute.xlu0 %1076
      %1078 = vrot.lane.b32.xlu0 %v1014, 120
      %v1079 = vpop.permute.xlu0 %1078
      %1080 = vrot.lane.b32.xlu0 %v1015, 120
      %v1081 = vpop.permute.xlu0 %1080
      %1082 = vrot.lane.b32.xlu0 %v1051, 120
      %v1083 = vpop.permute.xlu0 %1082
      %1084 = vrot.lane.b32.xlu0 %v1043, 120
      %v1085 = vpop.permute.xlu0 %1084
      %1086 = vrot.lane.b32.xlu0 %v1016, 120
      %v1087 = vpop.permute.xlu0 %1086
      %1088 = vrot.lane.b32.xlu0 %v1017, 120
      %v1089 = vpop.permute.xlu0 %1088
      %1090 = vrot.lane.b32.xlu0 %v1018, 120
      %v1091 = vpop.permute.xlu0 %1090
      %1092 = vrot.lane.b32.xlu0 %v1053, 120
      %v1093 = vpop.permute.xlu0 %1092
      %1094 = vrot.lane.b32.xlu0 %v1046, 120
      %v1095 = vpop.permute.xlu0 %1094
      %1096 = vrot.lane.b32.xlu0 %v1019, 120
      %v1097 = vpop.permute.xlu0 %1096
      %1098 = vrot.lane.b32.xlu0 %v1020, 120
      %v1099 = vpop.permute.xlu0 %1098
      %1100 = vrot.lane.b32.xlu0 %v1021, 120
      %v1101 = vpop.permute.xlu0 %1100
      %1102 = vrot.lane.b32.xlu0 %v1055, 120
      %v1103 = vpop.permute.xlu0 %1102
      %v1104 = vsel %vm387, %v1065, %v1067
      %v1105 = vsel %vm387, %v1067, %v1069
      %v1106 = vsel %vm387, %v1069, %v1071
      %v1107 = vsel %vm387, %v1071, %v1073
      %v1108 = vsel %vm387, %v1075, %v1077
      %v1109 = vsel %vm387, %v1077, %v1079
      %v1110 = vsel %vm387, %v1079, %v1081
      %v1111 = vsel %vm387, %v1081, %v1083
      %v1112 = vsel %vm387, %v1085, %v1087
      %v1113 = vsel %vm387, %v1087, %v1089
      %v1114 = vsel %vm387, %v1089, %v1091
      %v1115 = vsel %vm387, %v1091, %v1093
      %v1116 = vsel %vm387, %v1095, %v1097
      %v1117 = vsel %vm387, %v1097, %v1099
      %v1118 = vsel %vm387, %v1099, %v1101
      %v1119 = vsel %vm387, %v1101, %v1103
      %1136 = vrot.lane.b32.xlu0 %v1037, 112
      %v1137 = vpop.permute.xlu0 %1136
      %1138 = vrot.lane.b32.xlu0 %v1010, 112
      %v1139 = vpop.permute.xlu0 %1138
      %1140 = vrot.lane.b32.xlu0 %v1011, 112
      %v1141 = vpop.permute.xlu0 %1140
      %1142 = vrot.lane.b32.xlu0 %v1012, 112
      %v1143 = vpop.permute.xlu0 %1142
      %1144 = vrot.lane.b32.xlu0 %v1049, 112
      %v1145 = vpop.permute.xlu0 %1144
      %vm1146 = vcmask 916480
      %v1147 = vsel %vm1146, %v1137, %v1139
      %v1148 = vsel %vm1146, %v1139, %v1141
      %v1149 = vsel %vm1146, %v1141, %v1143
      %v1150 = vsel %vm1146, %v1143, %v1145
      %1155 = vrot.lane.b32.xlu0 %v1040, 112
      %v1156 = vpop.permute.xlu0 %1155
      %1157 = vrot.lane.b32.xlu0 %v1013, 112
      %v1158 = vpop.permute.xlu0 %1157
      %1159 = vrot.lane.b32.xlu0 %v1014, 112
      %v1160 = vpop.permute.xlu0 %1159
      %1161 = vrot.lane.b32.xlu0 %v1015, 112
      %v1162 = vpop.permute.xlu0 %1161
      %1163 = vrot.lane.b32.xlu0 %v1051, 112
      %v1164 = vpop.permute.xlu0 %1163
      %1165 = vrot.lane.b32.xlu0 %v1043, 112
      %v1166 = vpop.permute.xlu0 %1165
      %1167 = vrot.lane.b32.xlu0 %v1016, 112
      %v1168 = vpop.permute.xlu0 %1167
      %1169 = vrot.lane.b32.xlu0 %v1017, 112
      %v1170 = vpop.permute.xlu0 %1169
      %1171 = vrot.lane.b32.xlu0 %v1018, 112
      %v1172 = vpop.permute.xlu0 %1171
      %1173 = vrot.lane.b32.xlu0 %v1053, 112
      %v1174 = vpop.permute.xlu0 %1173
      %v1175 = vsel %vm1146, %v1156, %v1158
      %v1176 = vsel %vm1146, %v1158, %v1160
      %v1177 = vsel %vm1146, %v1160, %v1162
      %v1178 = vsel %vm1146, %v1162, %v1164
      %v1179 = vsel %vm1146, %v1166, %v1168
      %v1180 = vsel %vm1146, %v1168, %v1170
      %v1181 = vsel %vm1146, %v1170, %v1172
      %v1182 = vsel %vm1146, %v1172, %v1174
      %v1191 = vld [vmem:[%s3] sm:$0xff]
      %v1192 = vld [vmem:[%s3 + $0x8] sm:$0xff]
      %v1193 = vld [vmem:[%s3 + $0x10] sm:$0xff]
      %v1194 = vld [vmem:[%s3 + $0x18] sm:$0xff]
      %v1195 = vld [vmem:[%s4] sm:$0xff]
      %v1196 = vld [vmem:[%s4 + $0x8] sm:$0xff]
      %v1197 = vld [vmem:[%s4 + $0x10] sm:$0xff]
      %v1198 = vld [vmem:[%s4 + $0x18] sm:$0xff]
      %1200 = vset.pattern.permute.xlu0 0
      %1201 = vperm.xlu0 %1200, %v1195
      %v1202 = vpop.permute.xlu0 %1201
      %1205 = vset.pattern.permute.xlu0 0
      %1206 = vperm.xlu0 %1205, %v1196
      %v1207 = vpop.permute.xlu0 %1206
      %1210 = vset.pattern.permute.xlu0 0
      %1211 = vperm.xlu0 %1210, %v1197
      %v1212 = vpop.permute.xlu0 %1211
      %1215 = vset.pattern.permute.xlu0 0
      %1216 = vperm.xlu0 %1215, %v1198
      %v1217 = vpop.permute.xlu0 %1216
      %v1223 = vunpack.c.l.b16 %v1191
      %v1224 = vunpack.c.h.b16 %v1191
      %v1225 = vunpack.c.l.b16 %v1192
      %v1226 = vunpack.c.h.b16 %v1192
      %v1227 = vunpack.c.l.b16 %v1193
      %v1228 = vunpack.c.h.b16 %v1193
      %v1229 = vunpack.c.l.b16 %v1194
      %v1230 = vunpack.c.h.b16 %v1194
      %v1231 = vpack.c.b16 %v1225, %v1223
      %v1232 = vpack.c.b16 %v1226, %v1224
      %v1233 = vpack.c.b16 %v1229, %v1227
      %v1234 = vpack.c.b16 %v1230, %v1228
      %vm1237 = vcmask 130048
      %v1239 = vsel %vm1237, %v1232, 0
      %v1242 = vsel %vm1237, %v1234, 0
      %1244 = vmatprep.subr.bf16.mxu0 %v1117
      %1245 = vmatpush1.bf16.msra.mxu0 %v1116
      %1246 = vmatprep.subr.bf16.mxu0 %v1113
      %1247 = vmatpush1.bf16.msra.mxu0 %v1112
      %1248 = vmatprep.subr.bf16.mxu0 %v1109
      %1249 = vmatpush1.bf16.msra.mxu0 %v1108
      %1250 = vmatprep.subr.bf16.mxu0 %v1105
      %1251 = vmatpush1.bf16.msra.mxu0 %v1104
      %1252 = vmatprep.subr.bf16.mxu0 %v1019
      %1253 = vmatpush1.bf16.msra.mxu0 %v1046
      %1254 = vmatprep.subr.bf16.mxu0 %v1016
      %1255 = vmatpush1.bf16.msra.mxu0 %v1043
      %1256 = vmatprep.subr.bf16.mxu0 %v1013
      %1257 = vmatpush1.bf16.msra.mxu0 %v1040
      %1258 = vmatprep.subr.bf16.mxu0 %v1010
      %1259 = vmatpush1.bf16.msra.mxu0 %v1037
      %1260 = vmatprep.subr.bf16.mxu0 0
      %1261 = vmatpush2.bf16.msra.mxu0 0
      %1262 = vmatprep.subr.bf16.mxu0 0
      %1263 = vmatpush2.bf16.msra.mxu0 0
      %1264 = vmatprep.subr.bf16.mxu0 0
      %1265 = vmatpush2.bf16.msra.mxu0 0
      %1266 = vmatprep.subr.bf16.mxu0 0
      %1267 = vmatpush2.bf16.msra.mxu0 0
      %1268 = vmatprep.subr.bf16.mxu0 0
      %1269 = vmatpush2.bf16.msra.mxu0 0
      %1270 = vmatprep.subr.bf16.mxu0 0
      %1271 = vmatpush2.bf16.msra.mxu0 0
      %1272 = vmatprep.subr.bf16.mxu0 0
      %1273 = vmatpush2.bf16.msra.mxu0 0
      %1274 = vmatprep.subr.bf16.mxu0 %v1148
      %1275 = vmatpush2.bf16.msra.mxu0 %v1147
      %1276 = vmatprep.mubr.bf16.mxu0 %v1239
      %1277 = vmatmul.mubr.bf16.gmra.mxu0 %v1231
      %v1278 = vpop.f32.mrf.mxu0
      %v1279 = vadd.f32 %v1202, %v1278
      %v1280 = vpop.f32.mrf.mxu0
      %v1281 = vadd.f32 %v1202, %v1280
      %v1282 = vpop.f32.mrf.mxu0
      %v1283 = vadd.f32 %v1207, %v1282
      %v1284 = vpop.f32.mrf.mxu0
      %v1285 = vadd.f32 %v1207, %v1284
      %1286 = vmatprep.mubr.bf16.mxu0 %v1242
      %1287 = vmatmul.mubr.bf16.gmra.mxu0 %v1233
      %v1288 = vpop.f32.mrf.mxu0
      %v1289 = vadd.f32 %v1212, %v1288
      %v1290 = vpop.f32.mrf.mxu0
      %v1291 = vadd.f32 %v1212, %v1290
      %v1292 = vpop.f32.mrf.mxu0
      %v1293 = vadd.f32 %v1217, %v1292
      %v1294 = vpop.f32.mrf.mxu0
      %v1295 = vadd.f32 %v1217, %v1294
      %1296 = vdwg.mxu0
      %1297 = vmatprep.subr.bf16.mxu0 %v1119
      %1298 = vmatpush1.bf16.msra.mxu0 %v1118
      %1299 = vmatprep.subr.bf16.mxu0 %v1115
      %1300 = vmatpush1.bf16.msra.mxu0 %v1114
      %1301 = vmatprep.subr.bf16.mxu0 %v1111
      %1302 = vmatpush1.bf16.msra.mxu0 %v1110
      %1303 = vmatprep.subr.bf16.mxu0 %v1107
      %1304 = vmatpush1.bf16.msra.mxu0 %v1106
      %1305 = vmatprep.subr.bf16.mxu0 %v1021
      %1306 = vmatpush1.bf16.msra.mxu0 %v1020
      %1307 = vmatprep.subr.bf16.mxu0 %v1018
      %1308 = vmatpush1.bf16.msra.mxu0 %v1017
      %1309 = vmatprep.subr.bf16.mxu0 %v1015
      %1310 = vmatpush1.bf16.msra.mxu0 %v1014
      %1311 = vmatprep.subr.bf16.mxu0 %v1012
      %1312 = vmatpush1.bf16.msra.mxu0 %v1011
      %1313 = vmatprep.subr.bf16.mxu0 0
      %1314 = vmatpush2.bf16.msra.mxu0 0
      %1315 = vmatprep.subr.bf16.mxu0 0
      %1316 = vmatpush2.bf16.msra.mxu0 0
      %1317 = vmatprep.subr.bf16.mxu0 0
      %1318 = vmatpush2.bf16.msra.mxu0 0
      %1319 = vmatprep.subr.bf16.mxu0 0
      %1320 = vmatpush2.bf16.msra.mxu0 0
      %1321 = vmatprep.subr.bf16.mxu0 0
      %1322 = vmatpush2.bf16.msra.mxu0 0
      %1323 = vmatprep.subr.bf16.mxu0 0
      %1324 = vmatpush2.bf16.msra.mxu0 0
      %1325 = vmatprep.subr.bf16.mxu0 0
      %1326 = vmatpush2.bf16.msra.mxu0 0
      %1327 = vmatprep.subr.bf16.mxu0 %v1150
      %1328 = vmatpush2.bf16.msra.mxu0 %v1149
      %1329 = vmatprep.mubr.bf16.mxu0 %v1239
      %1330 = vmatmul.mubr.bf16.gmra.mxu0 %v1231
      %v1331 = vpop.f32.mrf.mxu0
      %v1332 = vadd.f32 %v1202, %v1331
      %v1333 = vpop.f32.mrf.mxu0
      %v1334 = vadd.f32 %v1202, %v1333
      %v1335 = vpop.f32.mrf.mxu0
      %v1336 = vadd.f32 %v1207, %v1335
      %v1337 = vpop.f32.mrf.mxu0
      %v1338 = vadd.f32 %v1207, %v1337
      %1339 = vmatprep.mubr.bf16.mxu0 %v1242
      %1340 = vmatmul.mubr.bf16.gmra.mxu0 %v1233
      %v1341 = vpop.f32.mrf.mxu0
      %v1342 = vadd.f32 %v1212, %v1341
      %v1343 = vpop.f32.mrf.mxu0
      %v1344 = vadd.f32 %v1212, %v1343
      %v1345 = vpop.f32.mrf.mxu0
      %v1346 = vadd.f32 %v1217, %v1345
      %v1347 = vpop.f32.mrf.mxu0
      %v1348 = vadd.f32 %v1217, %v1347
      %1349 = vdwg.mxu0
      %v1350 = vmax.f32 %v1279, 0.0
      %v1351 = vmax.f32 %v1281, 0.0
      %v1352 = vmax.f32 %v1332, 0.0
      %v1353 = vmax.f32 %v1334, 0.0
      %v1354 = vmax.f32 %v1283, 0.0
      %v1355 = vmax.f32 %v1285, 0.0
      %v1356 = vmax.f32 %v1336, 0.0
      %v1357 = vmax.f32 %v1338, 0.0
      %v1358 = vmax.f32 %v1289, 0.0
      %v1359 = vmax.f32 %v1291, 0.0
      %v1360 = vmax.f32 %v1342, 0.0
      %v1361 = vmax.f32 %v1344, 0.0
      %v1362 = vmax.f32 %v1293, 0.0
      %v1363 = vmax.f32 %v1295, 0.0
      %v1364 = vmax.f32 %v1346, 0.0
      %v1365 = vmax.f32 %v1348, 0.0
      %1366 = vmatprep.subr.bf16.mxu0 %v1176
      %1367 = vmatpush1.bf16.msra.mxu0 %v1175
      %1368 = vmatprep.subr.bf16.mxu0 %v1148
      %1369 = vmatpush1.bf16.msra.mxu0 %v1147
      %1370 = vmatprep.subr.bf16.mxu0 %v1117
      %1371 = vmatpush1.bf16.msra.mxu0 %v1116
      %1372 = vmatprep.subr.bf16.mxu0 %v1113
      %1373 = vmatpush1.bf16.msra.mxu0 %v1112
      %1374 = vmatprep.subr.bf16.mxu0 %v1109
      %1375 = vmatpush1.bf16.msra.mxu0 %v1108
      %1376 = vmatprep.subr.bf16.mxu0 %v1105
      %1377 = vmatpush1.bf16.msra.mxu0 %v1104
      %1378 = vmatprep.subr.bf16.mxu0 %v1019
      %1379 = vmatpush1.bf16.msra.mxu0 %v1046
      %1380 = vmatprep.subr.bf16.mxu0 %v1016
      %1381 = vmatpush1.bf16.msra.mxu0 %v1043
      %1382 = vmatprep.subr.bf16.mxu0 0
      %1383 = vmatpush2.bf16.msra.mxu0 0
      %1384 = vmatprep.subr.bf16.mxu0 0
      %1385 = vmatpush2.bf16.msra.mxu0 0
      %1386 = vmatprep.subr.bf16.mxu0 0
      %1387 = vmatpush2.bf16.msra.mxu0 0
      %1388 = vmatprep.subr.bf16.mxu0 0
      %1389 = vmatpush2.bf16.msra.mxu0 0
      %1390 = vmatprep.subr.bf16.mxu0 0
      %1391 = vmatpush2.bf16.msra.mxu0 0
      %1392 = vmatprep.subr.bf16.mxu0 0
      %1393 = vmatpush2.bf16.msra.mxu0 0
      %1394 = vmatprep.subr.bf16.mxu0 0
      %1395 = vmatpush2.bf16.msra.mxu0 0
      %1396 = vmatprep.subr.bf16.mxu0 %v1180
      %1397 = vmatpush2.bf16.msra.mxu0 %v1179
      %1398 = vmatprep.mubr.bf16.mxu0 %v1239
      %1399 = vmatmul.mubr.bf16.gmra.mxu0 %v1231
      %v1400 = vpop.f32.mrf.mxu0
      %v1401 = vadd.f32 %v1202, %v1400
      %v1402 = vpop.f32.mrf.mxu0
      %v1403 = vadd.f32 %v1202, %v1402
      %v1404 = vpop.f32.mrf.mxu0
      %v1405 = vadd.f32 %v1207, %v1404
      %v1406 = vpop.f32.mrf.mxu0
      %v1407 = vadd.f32 %v1207, %v1406
      %1408 = vmatprep.mubr.bf16.mxu0 %v1242
      %1409 = vmatmul.mubr.bf16.gmra.mxu0 %v1233
      %v1410 = vpop.f32.mrf.mxu0
      %v1411 = vadd.f32 %v1212, %v1410
      %v1412 = vpop.f32.mrf.mxu0
      %v1413 = vadd.f32 %v1212, %v1412
      %v1414 = vpop.f32.mrf.mxu0
      %v1415 = vadd.f32 %v1217, %v1414
      %v1416 = vpop.f32.mrf.mxu0
      %v1417 = vadd.f32 %v1217, %v1416
      %1418 = vdwg.mxu0
      %1419 = vmatprep.subr.bf16.mxu0 %v1178
      %1420 = vmatpush1.bf16.msra.mxu0 %v1177
      %1421 = vmatprep.subr.bf16.mxu0 %v1150
      %1422 = vmatpush1.bf16.msra.mxu0 %v1149
      %1423 = vmatprep.subr.bf16.mxu0 %v1119
      %1424 = vmatpush1.bf16.msra.mxu0 %v1118
      %1425 = vmatprep.subr.bf16.mxu0 %v1115
      %1426 = vmatpush1.bf16.msra.mxu0 %v1114
      %1427 = vmatprep.subr.bf16.mxu0 %v1111
      %1428 = vmatpush1.bf16.msra.mxu0 %v1110
      %1429 = vmatprep.subr.bf16.mxu0 %v1107
      %1430 = vmatpush1.bf16.msra.mxu0 %v1106
      %1431 = vmatprep.subr.bf16.mxu0 %v1021
      %1432 = vmatpush1.bf16.msra.mxu0 %v1020
      %1433 = vmatprep.subr.bf16.mxu0 %v1018
      %1434 = vmatpush1.bf16.msra.mxu0 %v1017
      %1435 = vmatprep.subr.bf16.mxu0 0
      %1436 = vmatpush2.bf16.msra.mxu0 0
      %1437 = vmatprep.subr.bf16.mxu0 0
      %1438 = vmatpush2.bf16.msra.mxu0 0
      %1439 = vmatprep.subr.bf16.mxu0 0
      %1440 = vmatpush2.bf16.msra.mxu0 0
      %1441 = vmatprep.subr.bf16.mxu0 0
      %1442 = vmatpush2.bf16.msra.mxu0 0
      %1443 = vmatprep.subr.bf16.mxu0 0
      %1444 = vmatpush2.bf16.msra.mxu0 0
      %1445 = vmatprep.subr.bf16.mxu0 0
      %1446 = vmatpush2.bf16.msra.mxu0 0
      %1447 = vmatprep.subr.bf16.mxu0 0
      %1448 = vmatpush2.bf16.msra.mxu0 0
      %1449 = vmatprep.subr.bf16.mxu0 %v1182
      %1450 = vmatpush2.bf16.msra.mxu0 %v1181
      %1451 = vmatprep.mubr.bf16.mxu0 %v1239
      %1452 = vmatmul.mubr.bf16.gmra.mxu0 %v1231
      %v1453 = vpop.f32.mrf.mxu0
      %v1454 = vadd.f32 %v1202, %v1453
      %v1455 = vpop.f32.mrf.mxu0
      %v1456 = vadd.f32 %v1202, %v1455
      %v1457 = vpop.f32.mrf.mxu0
      %v1458 = vadd.f32 %v1207, %v1457
      %v1459 = vpop.f32.mrf.mxu0
      %v1460 = vadd.f32 %v1207, %v1459
      %1461 = vmatprep.mubr.bf16.mxu0 %v1242
      %1462 = vmatmul.mubr.bf16.gmra.mxu0 %v1233
      %v1463 = vpop.f32.mrf.mxu0
      %v1464 = vadd.f32 %v1212, %v1463
      %v1465 = vpop.f32.mrf.mxu0
      %v1466 = vadd.f32 %v1212, %v1465
      %v1467 = vpop.f32.mrf.mxu0
      %v1468 = vadd.f32 %v1217, %v1467
      %v1469 = vpop.f32.mrf.mxu0
      %v1470 = vadd.f32 %v1217, %v1469
      %1471 = vdwg.mxu0
      %v1472 = vmax.f32 %v1401, 0.0
      %v1473 = vmax.f32 %v1403, 0.0
      %v1474 = vmax.f32 %v1454, 0.0
      %v1475 = vmax.f32 %v1456, 0.0
      %v1476 = vmax.f32 %v1405, 0.0
      %v1477 = vmax.f32 %v1407, 0.0
      %v1478 = vmax.f32 %v1458, 0.0
      %v1479 = vmax.f32 %v1460, 0.0
      %v1480 = vmax.f32 %v1411, 0.0
      %v1481 = vmax.f32 %v1413, 0.0
      %v1482 = vmax.f32 %v1464, 0.0
      %v1483 = vmax.f32 %v1466, 0.0
      %v1484 = vmax.f32 %v1415, 0.0
      %v1485 = vmax.f32 %v1417, 0.0
      %v1486 = vmax.f32 %v1468, 0.0
      %v1487 = vmax.f32 %v1470, 0.0
      %v1488 = vpack.c.bf16 %v1354, %v1350
      %v1489 = vpack.c.bf16 %v1355, %v1351
      %v1490 = vpack.c.bf16 %v1356, %v1352
      %v1491 = vpack.c.bf16 %v1357, %v1353
      %v1492 = vpack.c.bf16 %v1362, %v1358
      %v1493 = vpack.c.bf16 %v1363, %v1359
      %v1494 = vpack.c.bf16 %v1364, %v1360
      %v1495 = vpack.c.bf16 %v1365, %v1361
      %v1496 = vpack.c.bf16 %v1476, %v1472
      %v1497 = vpack.c.bf16 %v1477, %v1473
      %v1498 = vpack.c.bf16 %v1478, %v1474
      %v1499 = vpack.c.bf16 %v1479, %v1475
      %v1500 = vpack.c.bf16 %v1484, %v1480
      %v1501 = vpack.c.bf16 %v1485, %v1481
      %v1502 = vpack.c.bf16 %v1486, %v1482
      %v1503 = vpack.c.bf16 %v1487, %v1483
      %1520 = vrot.lane.b32.xlu0 %v1488, 16
      %v1521 = vpop.permute.xlu0 %1520
      %1522 = vrot.lane.b32.xlu0 %v1489, 16
      %v1523 = vpop.permute.xlu0 %1522
      %1524 = vrot.lane.b32.xlu0 %v1490, 16
      %v1525 = vpop.permute.xlu0 %1524
      %1526 = vrot.lane.b32.xlu0 %v1491, 16
      %v1527 = vpop.permute.xlu0 %1526
      %1528 = vrot.lane.b32.xlu0 %v1492, 16
      %v1529 = vpop.permute.xlu0 %1528
      %1530 = vrot.lane.b32.xlu0 %v1493, 16
      %v1531 = vpop.permute.xlu0 %1530
      %1532 = vrot.lane.b32.xlu0 %v1494, 16
      %v1533 = vpop.permute.xlu0 %1532
      %1534 = vrot.lane.b32.xlu0 %v1495, 16
      %v1535 = vpop.permute.xlu0 %1534
      %1536 = vrot.lane.b32.xlu0 %v1496, 16
      %v1537 = vpop.permute.xlu0 %1536
      %1538 = vrot.lane.b32.xlu0 %v1497, 16
      %v1539 = vpop.permute.xlu0 %1538
      %1540 = vrot.lane.b32.xlu0 %v1498, 16
      %v1541 = vpop.permute.xlu0 %1540
      %1542 = vrot.lane.b32.xlu0 %v1499, 16
      %v1543 = vpop.permute.xlu0 %1542
      %1544 = vrot.lane.b32.xlu0 %v1500, 16
      %v1545 = vpop.permute.xlu0 %1544
      %1546 = vrot.lane.b32.xlu0 %v1501, 16
      %v1547 = vpop.permute.xlu0 %1546
      %1548 = vrot.lane.b32.xlu0 %v1502, 16
      %v1549 = vpop.permute.xlu0 %1548
      %1550 = vrot.lane.b32.xlu0 %v1503, 16
      %v1551 = vpop.permute.xlu0 %1550
      %vm1552 = vcmask 130048
      %v1553 = vsel %vm1552, %v1521, %v1523
      %v1554 = vsel %vm1552, %v1523, %v1525
      %v1555 = vsel %vm1552, %v1525, %v1527
      %v1556 = vsel %vm1552, %v1529, %v1531
      %v1557 = vsel %vm1552, %v1531, %v1533
      %v1558 = vsel %vm1552, %v1533, %v1535
      %v1559 = vsel %vm1552, %v1537, %v1539
      %v1560 = vsel %vm1552, %v1539, %v1541
      %v1561 = vsel %vm1552, %v1541, %v1543
      %v1562 = vsel %vm1552, %v1545, %v1547
      %v1563 = vsel %vm1552, %v1547, %v1549
      %v1564 = vsel %vm1552, %v1549, %v1551
      %v1578 = vsel %vm1237, 0, %v1521
      %v1581 = vsel %vm1237, 0, %v1529
      %v1584 = vsel %vm1237, 0, %v1537
      %v1587 = vsel %vm1237, 0, %v1545
      %v1590 = vsel %vm1237, %v1527, 0
      %v1592 = vsel %vm1237, %v1535, 0
      %v1594 = vsel %vm1237, %v1543, 0
      %v1596 = vsel %vm1237, %v1551, 0
      %1605 = vrot.lane.b32.xlu0 %v1578, 120
      %v1606 = vpop.permute.xlu0 %1605
      %1607 = vrot.lane.b32.xlu0 %v1553, 120
      %v1608 = vpop.permute.xlu0 %1607
      %1609 = vrot.lane.b32.xlu0 %v1554, 120
      %v1610 = vpop.permute.xlu0 %1609
      %1611 = vrot.lane.b32.xlu0 %v1555, 120
      %v1612 = vpop.permute.xlu0 %1611
      %1613 = vrot.lane.b32.xlu0 %v1590, 120
      %v1614 = vpop.permute.xlu0 %1613
      %1615 = vrot.lane.b32.xlu0 %v1581, 120
      %v1616 = vpop.permute.xlu0 %1615
      %1617 = vrot.lane.b32.xlu0 %v1556, 120
      %v1618 = vpop.permute.xlu0 %1617
      %1619 = vrot.lane.b32.xlu0 %v1557, 120
      %v1620 = vpop.permute.xlu0 %1619
      %1621 = vrot.lane.b32.xlu0 %v1558, 120
      %v1622 = vpop.permute.xlu0 %1621
      %1623 = vrot.lane.b32.xlu0 %v1592, 120
      %v1624 = vpop.permute.xlu0 %1623
      %1625 = vrot.lane.b32.xlu0 %v1584, 120
      %v1626 = vpop.permute.xlu0 %1625
      %1627 = vrot.lane.b32.xlu0 %v1559, 120
      %v1628 = vpop.permute.xlu0 %1627
      %1629 = vrot.lane.b32.xlu0 %v1560, 120
      %v1630 = vpop.permute.xlu0 %1629
      %1631 = vrot.lane.b32.xlu0 %v1561, 120
      %v1632 = vpop.permute.xlu0 %1631
      %1633 = vrot.lane.b32.xlu0 %v1594, 120
      %v1634 = vpop.permute.xlu0 %1633
      %1635 = vrot.lane.b32.xlu0 %v1587, 120
      %v1636 = vpop.permute.xlu0 %1635
      %1637 = vrot.lane.b32.xlu0 %v1562, 120
      %v1638 = vpop.permute.xlu0 %1637
      %1639 = vrot.lane.b32.xlu0 %v1563, 120
      %v1640 = vpop.permute.xlu0 %1639
      %1641 = vrot.lane.b32.xlu0 %v1564, 120
      %v1642 = vpop.permute.xlu0 %1641
      %1643 = vrot.lane.b32.xlu0 %v1596, 120
      %v1644 = vpop.permute.xlu0 %1643
      %v1645 = vsel %vm387, %v1606, %v1608
      %v1646 = vsel %vm387, %v1608, %v1610
      %v1647 = vsel %vm387, %v1610, %v1612
      %v1648 = vsel %vm387, %v1612, %v1614
      %v1649 = vsel %vm387, %v1616, %v1618
      %v1650 = vsel %vm387, %v1618, %v1620
      %v1651 = vsel %vm387, %v1620, %v1622
      %v1652 = vsel %vm387, %v1622, %v1624
      %v1653 = vsel %vm387, %v1626, %v1628
      %v1654 = vsel %vm387, %v1628, %v1630
      %v1655 = vsel %vm387, %v1630, %v1632
      %v1656 = vsel %vm387, %v1632, %v1634
      %v1657 = vsel %vm387, %v1636, %v1638
      %v1658 = vsel %vm387, %v1638, %v1640
      %v1659 = vsel %vm387, %v1640, %v1642
      %v1660 = vsel %vm387, %v1642, %v1644
      %1677 = vrot.lane.b32.xlu0 %v1578, 112
      %v1678 = vpop.permute.xlu0 %1677
      %1679 = vrot.lane.b32.xlu0 %v1553, 112
      %v1680 = vpop.permute.xlu0 %1679
      %1681 = vrot.lane.b32.xlu0 %v1554, 112
      %v1682 = vpop.permute.xlu0 %1681
      %1683 = vrot.lane.b32.xlu0 %v1555, 112
      %v1684 = vpop.permute.xlu0 %1683
      %1685 = vrot.lane.b32.xlu0 %v1590, 112
      %v1686 = vpop.permute.xlu0 %1685
      %1687 = vrot.lane.b32.xlu0 %v1581, 112
      %v1688 = vpop.permute.xlu0 %1687
      %1689 = vrot.lane.b32.xlu0 %v1556, 112
      %v1690 = vpop.permute.xlu0 %1689
      %1691 = vrot.lane.b32.xlu0 %v1557, 112
      %v1692 = vpop.permute.xlu0 %1691
      %1693 = vrot.lane.b32.xlu0 %v1558, 112
      %v1694 = vpop.permute.xlu0 %1693
      %1695 = vrot.lane.b32.xlu0 %v1592, 112
      %v1696 = vpop.permute.xlu0 %1695
      %1697 = vrot.lane.b32.xlu0 %v1584, 112
      %v1698 = vpop.permute.xlu0 %1697
      %1699 = vrot.lane.b32.xlu0 %v1559, 112
      %v1700 = vpop.permute.xlu0 %1699
      %1701 = vrot.lane.b32.xlu0 %v1560, 112
      %v1702 = vpop.permute.xlu0 %1701
      %1703 = vrot.lane.b32.xlu0 %v1561, 112
      %v1704 = vpop.permute.xlu0 %1703
      %1705 = vrot.lane.b32.xlu0 %v1594, 112
      %v1706 = vpop.permute.xlu0 %1705
      %1707 = vrot.lane.b32.xlu0 %v1587, 112
      %v1708 = vpop.permute.xlu0 %1707
      %1709 = vrot.lane.b32.xlu0 %v1562, 112
      %v1710 = vpop.permute.xlu0 %1709
      %1711 = vrot.lane.b32.xlu0 %v1563, 112
      %v1712 = vpop.permute.xlu0 %1711
      %1713 = vrot.lane.b32.xlu0 %v1564, 112
      %v1714 = vpop.permute.xlu0 %1713
      %1715 = vrot.lane.b32.xlu0 %v1596, 112
      %v1716 = vpop.permute.xlu0 %1715
      %v1717 = vsel %vm1146, %v1678, %v1680
      %v1718 = vsel %vm1146, %v1680, %v1682
      %v1719 = vsel %vm1146, %v1682, %v1684
      %v1720 = vsel %vm1146, %v1684, %v1686
      %v1721 = vsel %vm1146, %v1688, %v1690
      %v1722 = vsel %vm1146, %v1690, %v1692
      %v1723 = vsel %vm1146, %v1692, %v1694
      %v1724 = vsel %vm1146, %v1694, %v1696
      %v1725 = vsel %vm1146, %v1698, %v1700
      %v1726 = vsel %vm1146, %v1700, %v1702
      %v1727 = vsel %vm1146, %v1702, %v1704
      %v1728 = vsel %vm1146, %v1704, %v1706
      %v1729 = vsel %vm1146, %v1708, %v1710
      %v1730 = vsel %vm1146, %v1710, %v1712
      %v1731 = vsel %vm1146, %v1712, %v1714
      %v1732 = vsel %vm1146, %v1714, %v1716
      %1749 = vrot.lane.b32.xlu0 %v1578, 104
      %v1750 = vpop.permute.xlu0 %1749
      %1751 = vrot.lane.b32.xlu0 %v1553, 104
      %v1752 = vpop.permute.xlu0 %1751
      %1753 = vrot.lane.b32.xlu0 %v1554, 104
      %v1754 = vpop.permute.xlu0 %1753
      %1755 = vrot.lane.b32.xlu0 %v1555, 104
      %v1756 = vpop.permute.xlu0 %1755
      %1757 = vrot.lane.b32.xlu0 %v1590, 104
      %v1758 = vpop.permute.xlu0 %1757
      %1759 = vrot.lane.b32.xlu0 %v1581, 104
      %v1760 = vpop.permute.xlu0 %1759
      %1761 = vrot.lane.b32.xlu0 %v1556, 104
      %v1762 = vpop.permute.xlu0 %1761
      %1763 = vrot.lane.b32.xlu0 %v1557, 104
      %v1764 = vpop.permute.xlu0 %1763
      %1765 = vrot.lane.b32.xlu0 %v1558, 104
      %v1766 = vpop.permute.xlu0 %1765
      %1767 = vrot.lane.b32.xlu0 %v1592, 104
      %v1768 = vpop.permute.xlu0 %1767
      %1769 = vrot.lane.b32.xlu0 %v1584, 104
      %v1770 = vpop.permute.xlu0 %1769
      %1771 = vrot.lane.b32.xlu0 %v1559, 104
      %v1772 = vpop.permute.xlu0 %1771
      %1773 = vrot.lane.b32.xlu0 %v1560, 104
      %v1774 = vpop.permute.xlu0 %1773
      %1775 = vrot.lane.b32.xlu0 %v1561, 104
      %v1776 = vpop.permute.xlu0 %1775
      %1777 = vrot.lane.b32.xlu0 %v1594, 104
      %v1778 = vpop.permute.xlu0 %1777
      %1779 = vrot.lane.b32.xlu0 %v1587, 104
      %v1780 = vpop.permute.xlu0 %1779
      %1781 = vrot.lane.b32.xlu0 %v1562, 104
      %v1782 = vpop.permute.xlu0 %1781
      %1783 = vrot.lane.b32.xlu0 %v1563, 104
      %v1784 = vpop.permute.xlu0 %1783
      %1785 = vrot.lane.b32.xlu0 %v1564, 104
      %v1786 = vpop.permute.xlu0 %1785
      %1787 = vrot.lane.b32.xlu0 %v1596, 104
      %v1788 = vpop.permute.xlu0 %1787
      %vm1789 = vcmask 850944
      %v1790 = vsel %vm1789, %v1750, %v1752
      %v1791 = vsel %vm1789, %v1752, %v1754
      %v1792 = vsel %vm1789, %v1754, %v1756
      %v1793 = vsel %vm1789, %v1756, %v1758
      %v1794 = vsel %vm1789, %v1760, %v1762
      %v1795 = vsel %vm1789, %v1762, %v1764
      %v1796 = vsel %vm1789, %v1764, %v1766
      %v1797 = vsel %vm1789, %v1766, %v1768
      %v1798 = vsel %vm1789, %v1770, %v1772
      %v1799 = vsel %vm1789, %v1772, %v1774
      %v1800 = vsel %vm1789, %v1774, %v1776
      %v1801 = vsel %vm1789, %v1776, %v1778
      %v1802 = vsel %vm1789, %v1780, %v1782
      %v1803 = vsel %vm1789, %v1782, %v1784
      %v1804 = vsel %vm1789, %v1784, %v1786
      %v1805 = vsel %vm1789, %v1786, %v1788
      %1822 = vrot.lane.b32.xlu0 %v1578, 96
      %v1823 = vpop.permute.xlu0 %1822
      %1824 = vrot.lane.b32.xlu0 %v1553, 96
      %v1825 = vpop.permute.xlu0 %1824
      %1826 = vrot.lane.b32.xlu0 %v1554, 96
      %v1827 = vpop.permute.xlu0 %1826
      %1828 = vrot.lane.b32.xlu0 %v1555, 96
      %v1829 = vpop.permute.xlu0 %1828
      %1830 = vrot.lane.b32.xlu0 %v1590, 96
      %v1831 = vpop.permute.xlu0 %1830
      %1832 = vrot.lane.b32.xlu0 %v1581, 96
      %v1833 = vpop.permute.xlu0 %1832
      %1834 = vrot.lane.b32.xlu0 %v1556, 96
      %v1835 = vpop.permute.xlu0 %1834
      %1836 = vrot.lane.b32.xlu0 %v1557, 96
      %v1837 = vpop.permute.xlu0 %1836
      %1838 = vrot.lane.b32.xlu0 %v1558, 96
      %v1839 = vpop.permute.xlu0 %1838
      %1840 = vrot.lane.b32.xlu0 %v1592, 96
      %v1841 = vpop.permute.xlu0 %1840
      %vm1842 = vcmask 785408
      %v1843 = vsel %vm1842, %v1823, %v1825
      %v1844 = vsel %vm1842, %v1825, %v1827
      %v1845 = vsel %vm1842, %v1827, %v1829
      %v1846 = vsel %vm1842, %v1829, %v1831
      %v1847 = vsel %vm1842, %v1833, %v1835
      %v1848 = vsel %vm1842, %v1835, %v1837
      %v1849 = vsel %vm1842, %v1837, %v1839
      %v1850 = vsel %vm1842, %v1839, %v1841
      %v1859 = vld [vmem:[%s5] sm:$0xff]
      %v1860 = vld [vmem:[%s5 + $0x8] sm:$0xf]
      %v1861 = vld [vmem:[%s5 + $0xc] sm:$0xff]
      %v1862 = vld [vmem:[%s5 + $0x14] sm:$0xf]
      %v1863 = vld [vmem:[%s5 + $0x18] sm:$0xff]
      %v1864 = vld [vmem:[%s5 + $0x20] sm:$0xf]
      %v1865 = vld [vmem:[%s5 + $0x24] sm:$0xff]
      %v1866 = vld [vmem:[%s5 + $0x2c] sm:$0xf]
      %v1867 = vld [vmem:[%s5 + $0x30] sm:$0xff]
      %v1868 = vld [vmem:[%s5 + $0x38] sm:$0xf]
      %v1869 = vld [vmem:[%s5 + $0x3c] sm:$0xff]
      %v1870 = vld [vmem:[%s5 + $0x44] sm:$0xf]
      %v1871 = vld [vmem:[%s5 + $0x48] sm:$0xff]
      %v1872 = vld [vmem:[%s5 + $0x50] sm:$0xf]
      %v1873 = vld [vmem:[%s5 + $0x54] sm:$0xff]
      %v1874 = vld [vmem:[%s5 + $0x5c] sm:$0xf]
      %v1875 = vld [vmem:[%s6] sm:$0xff]
      %v1876 = vld [vmem:[%s6 + $0x8] sm:$0xff]
      %v1877 = vld [vmem:[%s6 + $0x10] sm:$0xff]
      %v1878 = vld [vmem:[%s6 + $0x18] sm:$0xff]
      %v1879 = vld [vmem:[%s6 + $0x20] sm:$0xff]
      %v1880 = vld [vmem:[%s6 + $0x28] sm:$0xff]
      %v1881 = vld [vmem:[%s6 + $0x30] sm:$0xff]
      %v1882 = vld [vmem:[%s6 + $0x38] sm:$0xff]
      %1884 = vset.pattern.permute.xlu0 0
      %1885 = vperm.xlu0 %1884, %v1875
      %v1886 = vpop.permute.xlu0 %1885
      %1889 = vset.pattern.permute.xlu0 0
      %1890 = vperm.xlu0 %1889, %v1876
      %v1891 = vpop.permute.xlu0 %1890
      %1894 = vset.pattern.permute.xlu0 0
      %1895 = vperm.xlu0 %1894, %v1877
      %v1896 = vpop.permute.xlu0 %1895
      %1899 = vset.pattern.permute.xlu0 0
      %1900 = vperm.xlu0 %1899, %v1878
      %v1901 = vpop.permute.xlu0 %1900
      %1904 = vset.pattern.permute.xlu0 0
      %1905 = vperm.xlu0 %1904, %v1879
      %v1906 = vpop.permute.xlu0 %1905
      %1909 = vset.pattern.permute.xlu0 0
      %1910 = vperm.xlu0 %1909, %v1880
      %v1911 = vpop.permute.xlu0 %1910
      %1914 = vset.pattern.permute.xlu0 0
      %1915 = vperm.xlu0 %1914, %v1881
      %v1916 = vpop.permute.xlu0 %1915
      %1919 = vset.pattern.permute.xlu0 0
      %1920 = vperm.xlu0 %1919, %v1882
      %v1921 = vpop.permute.xlu0 %1920
      %v1939 = vunpack.c.l.b16 %v1859
      %v1940 = vunpack.c.h.b16 %v1859
      %v1941 = vunpack.c.l.b16 %v1860
      %v1942 = vunpack.c.l.b16 %v1861
      %v1943 = vunpack.c.h.b16 %v1861
      %v1944 = vunpack.c.l.b16 %v1862
      %v1945 = vunpack.c.l.b16 %v1863
      %v1946 = vunpack.c.h.b16 %v1863
      %v1947 = vunpack.c.l.b16 %v1864
      %v1948 = vunpack.c.l.b16 %v1865
      %v1949 = vunpack.c.h.b16 %v1865
      %v1950 = vunpack.c.l.b16 %v1866
      %v1951 = vunpack.c.l.b16 %v1867
      %v1952 = vunpack.c.h.b16 %v1867
      %v1953 = vunpack.c.l.b16 %v1868
      %v1954 = vunpack.c.l.b16 %v1869
      %v1955 = vunpack.c.h.b16 %v1869
      %v1956 = vunpack.c.l.b16 %v1870
      %v1957 = vunpack.c.l.b16 %v1871
      %v1958 = vunpack.c.h.b16 %v1871
      %v1959 = vunpack.c.l.b16 %v1872
      %v1960 = vunpack.c.l.b16 %v1873
      %v1961 = vunpack.c.h.b16 %v1873
      %v1962 = vunpack.c.l.b16 %v1874
      %v1963 = vpack.c.b16 %v1942, %v1939
      %v1964 = vpack.c.b16 %v1943, %v1940
      %v1965 = vpack.c.b16 %v1944, %v1941
      %v1966 = vpack.c.b16 %v1948, %v1945
      %v1967 = vpack.c.b16 %v1949, %v1946
      %v1968 = vpack.c.b16 %v1950, %v1947
      %v1969 = vpack.c.b16 %v1954, %v1951
      %v1970 = vpack.c.b16 %v1955, %v1952
      %v1971 = vpack.c.b16 %v1956, %v1953
      %v1972 = vpack.c.b16 %v1960, %v1957
      %v1973 = vpack.c.b16 %v1961, %v1958
      %v1974 = vpack.c.b16 %v1962, %v1959
      %vm1983 = vcmask 261120
      %v1985 = vsel %vm1983, %v1965, 0
      %v1988 = vsel %vm1983, %v1968, 0
      %v1991 = vsel %vm1983, %v1971, 0
      %v1994 = vsel %vm1983, %v1974, 0
      %1996 = vmatprep.subr.bf16.mxu0 %v1658
      %1997 = vmatpush1.bf16.msra.mxu0 %v1657
      %1998 = vmatprep.subr.bf16.mxu0 %v1654
      %1999 = vmatpush1.bf16.msra.mxu0 %v1653
      %2000 = vmatprep.subr.bf16.mxu0 %v1650
      %2001 = vmatpush1.bf16.msra.mxu0 %v1649
      %2002 = vmatprep.subr.bf16.mxu0 %v1646
      %2003 = vmatpush1.bf16.msra.mxu0 %v1645
      %2004 = vmatprep.subr.bf16.mxu0 %v1562
      %2005 = vmatpush1.bf16.msra.mxu0 %v1587
      %2006 = vmatprep.subr.bf16.mxu0 %v1559
      %2007 = vmatpush1.bf16.msra.mxu0 %v1584
      %2008 = vmatprep.subr.bf16.mxu0 %v1556
      %2009 = vmatpush1.bf16.msra.mxu0 %v1581
      %2010 = vmatprep.subr.bf16.mxu0 %v1553
      %2011 = vmatpush1.bf16.msra.mxu0 %v1578
      %2012 = vmatprep.subr.bf16.mxu0 %v1803
      %2013 = vmatpush2.bf16.msra.mxu0 %v1802
      %2014 = vmatprep.subr.bf16.mxu0 %v1799
      %2015 = vmatpush2.bf16.msra.mxu0 %v1798
      %2016 = vmatprep.subr.bf16.mxu0 %v1795
      %2017 = vmatpush2.bf16.msra.mxu0 %v1794
      %2018 = vmatprep.subr.bf16.mxu0 %v1791
      %2019 = vmatpush2.bf16.msra.mxu0 %v1790
      %2020 = vmatprep.subr.bf16.mxu0 %v1730
      %2021 = vmatpush2.bf16.msra.mxu0 %v1729
      %2022 = vmatprep.subr.bf16.mxu0 %v1726
      %2023 = vmatpush2.bf16.msra.mxu0 %v1725
      %2024 = vmatprep.subr.bf16.mxu0 %v1722
      %2025 = vmatpush2.bf16.msra.mxu0 %v1721
      %2026 = vmatprep.subr.bf16.mxu0 %v1718
      %2027 = vmatpush2.bf16.msra.mxu0 %v1717
      %2028 = vmatprep.mubr.bf16.mxu0 %v1964
      %2029 = vmatmul.mubr.bf16.gmra.mxu0 %v1963
      %v2030 = vpop.f32.mrf.mxu0
      %v2031 = vadd.f32 %v1886, %v2030
      %v2032 = vpop.f32.mrf.mxu0
      %v2033 = vadd.f32 %v1886, %v2032
      %v2034 = vpop.f32.mrf.mxu0
      %v2035 = vadd.f32 %v1891, %v2034
      %v2036 = vpop.f32.mrf.mxu0
      %v2037 = vadd.f32 %v1891, %v2036
      %2038 = vmatprep.mubr.bf16.mxu0 %v1967
      %2039 = vmatmul.mubr.bf16.gmra.mxu0 %v1966
      %v2040 = vpop.f32.mrf.mxu0
      %v2041 = vadd.f32 %v1896, %v2040
      %v2042 = vpop.f32.mrf.mxu0
      %v2043 = vadd.f32 %v1896, %v2042
      %v2044 = vpop.f32.mrf.mxu0
      %v2045 = vadd.f32 %v1901, %v2044
      %v2046 = vpop.f32.mrf.mxu0
      %v2047 = vadd.f32 %v1901, %v2046
      %2048 = vmatprep.mubr.bf16.mxu0 %v1970
      %2049 = vmatmul.mubr.bf16.gmra.mxu0 %v1969
      %v2050 = vpop.f32.mrf.mxu0
      %v2051 = vadd.f32 %v1906, %v2050
      %v2052 = vpop.f32.mrf.mxu0
      %v2053 = vadd.f32 %v1906, %v2052
      %v2054 = vpop.f32.mrf.mxu0
      %v2055 = vadd.f32 %v1911, %v2054
      %v2056 = vpop.f32.mrf.mxu0
      %v2057 = vadd.f32 %v1911, %v2056
      %2058 = vmatprep.mubr.bf16.mxu0 %v1973
      %2059 = vmatmul.mubr.bf16.gmra.mxu0 %v1972
      %v2060 = vpop.f32.mrf.mxu0
      %v2061 = vadd.f32 %v1916, %v2060
      %v2062 = vpop.f32.mrf.mxu0
      %v2063 = vadd.f32 %v1916, %v2062
      %v2064 = vpop.f32.mrf.mxu0
      %v2065 = vadd.f32 %v1921, %v2064
      %v2066 = vpop.f32.mrf.mxu0
      %v2067 = vadd.f32 %v1921, %v2066
      %2068 = vdwg.mxu0
      %2069 = vmatprep.subr.bf16.mxu0 0
      %2070 = vmatpush1.bf16.msra.mxu0 0
      %2071 = vmatprep.subr.bf16.mxu0 0
      %2072 = vmatpush1.bf16.msra.mxu0 0
      %2073 = vmatprep.subr.bf16.mxu0 0
      %2074 = vmatpush1.bf16.msra.mxu0 0
      %2075 = vmatprep.subr.bf16.mxu0 0
      %2076 = vmatpush1.bf16.msra.mxu0 0
      %2077 = vmatprep.subr.bf16.mxu0 0
      %2078 = vmatpush1.bf16.msra.mxu0 0
      %2079 = vmatprep.subr.bf16.mxu0 0
      %2080 = vmatpush1.bf16.msra.mxu0 0
      %2081 = vmatprep.subr.bf16.mxu0 %v1848
      %2082 = vmatpush1.bf16.msra.mxu0 %v1847
      %2083 = vmatprep.subr.bf16.mxu0 %v1844
      %2084 = vmatpush1.bf16.msra.mxu0 %v1843
      %2085 = vmatprep.subr.bf16.mxu0 0
      %2086 = vmatpush2.bf16.msra.mxu0 0
      %2087 = vmatprep.subr.bf16.mxu0 0
      %2088 = vmatpush2.bf16.msra.mxu0 0
      %2089 = vmatprep.subr.bf16.mxu0 0
      %2090 = vmatpush2.bf16.msra.mxu0 0
      %2091 = vmatprep.subr.bf16.mxu0 0
      %2092 = vmatpush2.bf16.msra.mxu0 0
      %2093 = vmatprep.subr.bf16.mxu0 0
      %2094 = vmatpush2.bf16.msra.mxu0 0
      %2095 = vmatprep.subr.bf16.mxu0 0
      %2096 = vmatpush2.bf16.msra.mxu0 0
      %2097 = vmatprep.subr.bf16.mxu0 0
      %2098 = vmatpush2.bf16.msra.mxu0 0
      %2099 = vmatprep.subr.bf16.mxu0 0
      %2100 = vmatpush2.bf16.msra.mxu0 0
      %2101 = vmatprep.mubr.bf16.mxu0 0
      %2102 = vmatmul.mubr.bf16.gmra.mxu0 %v1985
      %v2103 = vpop.f32.mrf.mxu0
      %v2104 = vadd.f32 %v2031, %v2103
      %v2105 = vpop.f32.mrf.mxu0
      %v2106 = vadd.f32 %v2033, %v2105
      %v2107 = vpop.f32.mrf.mxu0
      %v2108 = vadd.f32 %v2035, %v2107
      %v2109 = vpop.f32.mrf.mxu0
      %v2110 = vadd.f32 %v2037, %v2109
      %2111 = vmatprep.mubr.bf16.mxu0 0
      %2112 = vmatmul.mubr.bf16.gmra.mxu0 %v1988
      %v2113 = vpop.f32.mrf.mxu0
      %v2114 = vadd.f32 %v2041, %v2113
      %v2115 = vpop.f32.mrf.mxu0
      %v2116 = vadd.f32 %v2043, %v2115
      %v2117 = vpop.f32.mrf.mxu0
      %v2118 = vadd.f32 %v2045, %v2117
      %v2119 = vpop.f32.mrf.mxu0
      %v2120 = vadd.f32 %v2047, %v2119
      %2121 = vmatprep.mubr.bf16.mxu0 0
      %2122 = vmatmul.mubr.bf16.gmra.mxu0 %v1991
      %v2123 = vpop.f32.mrf.mxu0
      %v2124 = vadd.f32 %v2051, %v2123
      %v2125 = vpop.f32.mrf.mxu0
      %v2126 = vadd.f32 %v2053, %v2125
      %v2127 = vpop.f32.mrf.mxu0
      %v2128 = vadd.f32 %v2055, %v2127
      %v2129 = vpop.f32.mrf.mxu0
      %v2130 = vadd.f32 %v2057, %v2129
      %2131 = vmatprep.mubr.bf16.mxu0 0
      %2132 = vmatmul.mubr.bf16.gmra.mxu0 %v1994
      %v2133 = vpop.f32.mrf.mxu0
      %v2134 = vadd.f32 %v2061, %v2133
      %v2135 = vpop.f32.mrf.mxu0
      %v2136 = vadd.f32 %v2063, %v2135
      %v2137 = vpop.f32.mrf.mxu0
      %v2138 = vadd.f32 %v2065, %v2137
      %v2139 = vpop.f32.mrf.mxu0
      %v2140 = vadd.f32 %v2067, %v2139
      %2141 = vdwg.mxu0
      %2142 = vmatprep.subr.bf16.mxu0 %v1660
      %2143 = vmatpush1.bf16.msra.mxu0 %v1659
      %2144 = vmatprep.subr.bf16.mxu0 %v1656
      %2145 = vmatpush1.bf16.msra.mxu0 %v1655
      %2146 = vmatprep.subr.bf16.mxu0 %v1652
      %2147 = vmatpush1.bf16.msra.mxu0 %v1651
      %2148 = vmatprep.subr.bf16.mxu0 %v1648
      %2149 = vmatpush1.bf16.msra.mxu0 %v1647
      %2150 = vmatprep.subr.bf16.mxu0 %v1564
      %2151 = vmatpush1.bf16.msra.mxu0 %v1563
      %2152 = vmatprep.subr.bf16.mxu0 %v1561
      %2153 = vmatpush1.bf16.msra.mxu0 %v1560
      %2154 = vmatprep.subr.bf16.mxu0 %v1558
      %2155 = vmatpush1.bf16.msra.mxu0 %v1557
      %2156 = vmatprep.subr.bf16.mxu0 %v1555
      %2157 = vmatpush1.bf16.msra.mxu0 %v1554
      %2158 = vmatprep.subr.bf16.mxu0 %v1805
      %2159 = vmatpush2.bf16.msra.mxu0 %v1804
      %2160 = vmatprep.subr.bf16.mxu0 %v1801
      %2161 = vmatpush2.bf16.msra.mxu0 %v1800
      %2162 = vmatprep.subr.bf16.mxu0 %v1797
      %2163 = vmatpush2.bf16.msra.mxu0 %v1796
      %2164 = vmatprep.subr.bf16.mxu0 %v1793
      %2165 = vmatpush2.bf16.msra.mxu0 %v1792
      %2166 = vmatprep.subr.bf16.mxu0 %v1732
      %2167 = vmatpush2.bf16.msra.mxu0 %v1731
      %2168 = vmatprep.subr.bf16.mxu0 %v1728
      %2169 = vmatpush2.bf16.msra.mxu0 %v1727
      %2170 = vmatprep.subr.bf16.mxu0 %v1724
      %2171 = vmatpush2.bf16.msra.mxu0 %v1723
      %2172 = vmatprep.subr.bf16.mxu0 %v1720
      %2173 = vmatpush2.bf16.msra.mxu0 %v1719
      %2174 = vmatprep.mubr.bf16.mxu0 %v1964
      %2175 = vmatmul.mubr.bf16.gmra.mxu0 %v1963
      %v2176 = vpop.f32.mrf.mxu0
      %v2177 = vadd.f32 %v1886, %v2176
      %v2178 = vpop.f32.mrf.mxu0
      %v2179 = vadd.f32 %v1886, %v2178
      %v2180 = vpop.f32.mrf.mxu0
      %v2181 = vadd.f32 %v1891, %v2180
      %v2182 = vpop.f32.mrf.mxu0
      %v2183 = vadd.f32 %v1891, %v2182
      %2184 = vmatprep.mubr.bf16.mxu0 %v1967
      %2185 = vmatmul.mubr.bf16.gmra.mxu0 %v1966
      %v2186 = vpop.f32.mrf.mxu0
      %v2187 = vadd.f32 %v1896, %v2186
      %v2188 = vpop.f32.mrf.mxu0
      %v2189 = vadd.f32 %v1896, %v2188
      %v2190 = vpop.f32.mrf.mxu0
      %v2191 = vadd.f32 %v1901, %v2190
      %v2192 = vpop.f32.mrf.mxu0
      %v2193 = vadd.f32 %v1901, %v2192
      %2194 = vmatprep.mubr.bf16.mxu0 %v1970
      %2195 = vmatmul.mubr.bf16.gmra.mxu0 %v1969
      %v2196 = vpop.f32.mrf.mxu0
      %v2197 = vadd.f32 %v1906, %v2196
      %v2198 = vpop.f32.mrf.mxu0
      %v2199 = vadd.f32 %v1906, %v2198
      %v2200 = vpop.f32.mrf.mxu0
      %v2201 = vadd.f32 %v1911, %v2200
      %v2202 = vpop.f32.mrf.mxu0
      %v2203 = vadd.f32 %v1911, %v2202
      %2204 = vmatprep.mubr.bf16.mxu0 %v1973
      %2205 = vmatmul.mubr.bf16.gmra.mxu0 %v1972
      %v2206 = vpop.f32.mrf.mxu0
      %v2207 = vadd.f32 %v1916, %v2206
      %v2208 = vpop.f32.mrf.mxu0
      %v2209 = vadd.f32 %v1916, %v2208
      %v2210 = vpop.f32.mrf.mxu0
      %v2211 = vadd.f32 %v1921, %v2210
      %v2212 = vpop.f32.mrf.mxu0
      %v2213 = vadd.f32 %v1921, %v2212
      %2214 = vdwg.mxu0
      %2215 = vmatprep.subr.bf16.mxu0 0
      %2216 = vmatpush1.bf16.msra.mxu0 0
      %2217 = vmatprep.subr.bf16.mxu0 0
      %2218 = vmatpush1.bf16.msra.mxu0 0
      %2219 = vmatprep.subr.bf16.mxu0 0
      %2220 = vmatpush1.bf16.msra.mxu0 0
      %2221 = vmatprep.subr.bf16.mxu0 0
      %2222 = vmatpush1.bf16.msra.mxu0 0
      %2223 = vmatprep.subr.bf16.mxu0 0
      %2224 = vmatpush1.bf16.msra.mxu0 0
      %2225 = vmatprep.subr.bf16.mxu0 0
      %2226 = vmatpush1.bf16.msra.mxu0 0
      %2227 = vmatprep.subr.bf16.mxu0 %v1850
      %2228 = vmatpush1.bf16.msra.mxu0 %v1849
      %2229 = vmatprep.subr.bf16.mxu0 %v1846
      %2230 = vmatpush1.bf16.msra.mxu0 %v1845
      %2231 = vmatprep.subr.bf16.mxu0 0
      %2232 = vmatpush2.bf16.msra.mxu0 0
      %2233 = vmatprep.subr.bf16.mxu0 0
      %2234 = vmatpush2.bf16.msra.mxu0 0
      %2235 = vmatprep.subr.bf16.mxu0 0
      %2236 = vmatpush2.bf16.msra.mxu0 0
      %2237 = vmatprep.subr.bf16.mxu0 0
      %2238 = vmatpush2.bf16.msra.mxu0 0
      %2239 = vmatprep.subr.bf16.mxu0 0
      %2240 = vmatpush2.bf16.msra.mxu0 0
      %2241 = vmatprep.subr.bf16.mxu0 0
      %2242 = vmatpush2.bf16.msra.mxu0 0
      %2243 = vmatprep.subr.bf16.mxu0 0
      %2244 = vmatpush2.bf16.msra.mxu0 0
      %2245 = vmatprep.subr.bf16.mxu0 0
      %2246 = vmatpush2.bf16.msra.mxu0 0
      %2247 = vmatprep.mubr.bf16.mxu0 0
      %2248 = vmatmul.mubr.bf16.gmra.mxu0 %v1985
      %v2249 = vpop.f32.mrf.mxu0
      %v2250 = vadd.f32 %v2177, %v2249
      %v2251 = vpop.f32.mrf.mxu0
      %v2252 = vadd.f32 %v2179, %v2251
      %v2253 = vpop.f32.mrf.mxu0
      %v2254 = vadd.f32 %v2181, %v2253
      %v2255 = vpop.f32.mrf.mxu0
      %v2256 = vadd.f32 %v2183, %v2255
      %2257 = vmatprep.mubr.bf16.mxu0 0
      %2258 = vmatmul.mubr.bf16.gmra.mxu0 %v1988
      %v2259 = vpop.f32.mrf.mxu0
      %v2260 = vadd.f32 %v2187, %v2259
      %v2261 = vpop.f32.mrf.mxu0
      %v2262 = vadd.f32 %v2189, %v2261
      %v2263 = vpop.f32.mrf.mxu0
      %v2264 = vadd.f32 %v2191, %v2263
      %v2265 = vpop.f32.mrf.mxu0
      %v2266 = vadd.f32 %v2193, %v2265
      %2267 = vmatprep.mubr.bf16.mxu0 0
      %2268 = vmatmul.mubr.bf16.gmra.mxu0 %v1991
      %v2269 = vpop.f32.mrf.mxu0
      %v2270 = vadd.f32 %v2197, %v2269
      %v2271 = vpop.f32.mrf.mxu0
      %v2272 = vadd.f32 %v2199, %v2271
      %v2273 = vpop.f32.mrf.mxu0
      %v2274 = vadd.f32 %v2201, %v2273
      %v2275 = vpop.f32.mrf.mxu0
      %v2276 = vadd.f32 %v2203, %v2275
      %2277 = vmatprep.mubr.bf16.mxu0 0
      %2278 = vmatmul.mubr.bf16.gmra.mxu0 %v1994
      %v2279 = vpop.f32.mrf.mxu0
      %v2280 = vadd.f32 %v2207, %v2279
      %v2281 = vpop.f32.mrf.mxu0
      %v2282 = vadd.f32 %v2209, %v2281
      %v2283 = vpop.f32.mrf.mxu0
      %v2284 = vadd.f32 %v2211, %v2283
      %v2285 = vpop.f32.mrf.mxu0
      %v2286 = vadd.f32 %v2213, %v2285
      %2287 = vdwg.mxu0
      %v2288 = vmax.f32 %v2104, 0.0
      %v2289 = vmax.f32 %v2106, 0.0
      %v2290 = vmax.f32 %v2250, 0.0
      %v2291 = vmax.f32 %v2252, 0.0
      %v2292 = vmax.f32 %v2108, 0.0
      %v2293 = vmax.f32 %v2110, 0.0
      %v2294 = vmax.f32 %v2254, 0.0
      %v2295 = vmax.f32 %v2256, 0.0
      %v2296 = vmax.f32 %v2114, 0.0
      %v2297 = vmax.f32 %v2116, 0.0
      %v2298 = vmax.f32 %v2260, 0.0
      %v2299 = vmax.f32 %v2262, 0.0
      %v2300 = vmax.f32 %v2118, 0.0
      %v2301 = vmax.f32 %v2120, 0.0
      %v2302 = vmax.f32 %v2264, 0.0
      %v2303 = vmax.f32 %v2266, 0.0
      %v2304 = vmax.f32 %v2124, 0.0
      %v2305 = vmax.f32 %v2126, 0.0
      %v2306 = vmax.f32 %v2270, 0.0
      %v2307 = vmax.f32 %v2272, 0.0
      %v2308 = vmax.f32 %v2128, 0.0
      %v2309 = vmax.f32 %v2130, 0.0
      %v2310 = vmax.f32 %v2274, 0.0
      %v2311 = vmax.f32 %v2276, 0.0
      %v2312 = vmax.f32 %v2134, 0.0
      %v2313 = vmax.f32 %v2136, 0.0
      %v2314 = vmax.f32 %v2280, 0.0
      %v2315 = vmax.f32 %v2282, 0.0
      %v2316 = vmax.f32 %v2138, 0.0
      %v2317 = vmax.f32 %v2140, 0.0
      %v2318 = vmax.f32 %v2284, 0.0
      %v2319 = vmax.f32 %v2286, 0.0
      %v2320 = vld [vmem:[%s9] sm:$0xff]
      %v2321 = vld [vmem:[%s9 + $0x8] sm:$0xff]
      %v2322 = vld [vmem:[%s9 + $0x10] sm:$0xff]
      %v2323 = vld [vmem:[%s9 + $0x18] sm:$0xff]
      %v2324 = vld [vmem:[%s9 + $0x20] sm:$0xff]
      %v2325 = vld [vmem:[%s9 + $0x28] sm:$0xff]
      %v2326 = vld [vmem:[%s9 + $0x30] sm:$0xff]
      %v2327 = vld [vmem:[%s9 + $0x38] sm:$0xff]
      %v2328 = vld [vmem:[%s9 + $0x40] sm:$0xff]
      %v2329 = vld [vmem:[%s9 + $0x48] sm:$0xff]
      %v2330 = vld [vmem:[%s9 + $0x50] sm:$0xff]
      %v2331 = vld [vmem:[%s9 + $0x58] sm:$0xff]
      %v2332 = vld [vmem:[%s9 + $0x60] sm:$0xff]
      %v2333 = vld [vmem:[%s9 + $0x68] sm:$0xff]
      %v2334 = vld [vmem:[%s9 + $0x70] sm:$0xff]
      %v2335 = vld [vmem:[%s9 + $0x78] sm:$0xff]
      %v2336 = vld [vmem:[%s9 + $0x80] sm:$0xff]
      %v2337 = vld [vmem:[%s9 + $0x88] sm:$0xff]
      %v2338 = vld [vmem:[%s9 + $0x90] sm:$0xff]
      %v2339 = vld [vmem:[%s9 + $0x98] sm:$0xff]
      %v2340 = vld [vmem:[%s9 + $0xa0] sm:$0xff]
      %v2341 = vld [vmem:[%s9 + $0xa8] sm:$0xff]
      %v2342 = vld [vmem:[%s9 + $0xb0] sm:$0xff]
      %v2343 = vld [vmem:[%s9 + $0xb8] sm:$0xff]
      %v2344 = vld [vmem:[%s9 + $0xc0] sm:$0xff]
      %v2345 = vld [vmem:[%s9 + $0xc8] sm:$0xff]
      %v2346 = vld [vmem:[%s9 + $0xd0] sm:$0xff]
      %v2347 = vld [vmem:[%s9 + $0xd8] sm:$0xff]
      %v2348 = vld [vmem:[%s9 + $0xe0] sm:$0xff]
      %v2349 = vld [vmem:[%s9 + $0xe8] sm:$0xff]
      %v2350 = vld [vmem:[%s9 + $0xf0] sm:$0xff]
      %v2351 = vld [vmem:[%s9 + $0xf8] sm:$0xff]
      %v2352 = vld [vmem:[%s9 + $0x100] sm:$0xff]
      %v2353 = vld [vmem:[%s9 + $0x108] sm:$0xff]
      %v2354 = vld [vmem:[%s9 + $0x110] sm:$0xff]
      %v2355 = vld [vmem:[%s9 + $0x118] sm:$0xff]
      %v2356 = vld [vmem:[%s9 + $0x120] sm:$0xff]
      %v2357 = vld [vmem:[%s9 + $0x128] sm:$0xff]
      %v2358 = vld [vmem:[%s9 + $0x130] sm:$0xff]
      %v2359 = vld [vmem:[%s9 + $0x138] sm:$0xff]
      %v2360 = vld [vmem:[%s9 + $0x140] sm:$0xff]
      %v2361 = vld [vmem:[%s9 + $0x148] sm:$0xff]
      %v2362 = vld [vmem:[%s9 + $0x150] sm:$0xff]
      %v2363 = vld [vmem:[%s9 + $0x158] sm:$0xff]
      %v2364 = vld [vmem:[%s9 + $0x160] sm:$0xff]
      %v2365 = vld [vmem:[%s9 + $0x168] sm:$0xff]
      %v2366 = vld [vmem:[%s9 + $0x170] sm:$0xff]
      %v2367 = vld [vmem:[%s9 + $0x178] sm:$0xff]
      %v2368 = vld [vmem:[%s9 + $0x180] sm:$0xff]
      %v2369 = vld [vmem:[%s9 + $0x188] sm:$0xff]
      %v2370 = vld [vmem:[%s9 + $0x190] sm:$0xff]
      %v2371 = vld [vmem:[%s9 + $0x198] sm:$0xff]
      %v2372 = vld [vmem:[%s9 + $0x1a0] sm:$0xff]
      %v2373 = vld [vmem:[%s9 + $0x1a8] sm:$0xff]
      %v2374 = vld [vmem:[%s9 + $0x1b0] sm:$0xff]
      %v2375 = vld [vmem:[%s9 + $0x1b8] sm:$0xff]
      %v2376 = vld [vmem:[%s9 + $0x1c0] sm:$0xff]
      %v2377 = vld [vmem:[%s9 + $0x1c8] sm:$0xff]
      %v2378 = vld [vmem:[%s9 + $0x1d0] sm:$0xff]
      %v2379 = vld [vmem:[%s9 + $0x1d8] sm:$0xff]
      %v2380 = vld [vmem:[%s9 + $0x1e0] sm:$0xff]
      %v2381 = vld [vmem:[%s9 + $0x1e8] sm:$0xff]
      %v2382 = vld [vmem:[%s9 + $0x1f0] sm:$0xff]
      %v2383 = vld [vmem:[%s9 + $0x1f8] sm:$0xff]
      %2384 = vmatprep.subr.mxu0 0.0
      %2385 = vmatpush1.msra.mxu0 %v2335
      %2386 = vmatprep.subr.mxu0 0.0
      %2387 = vmatpush1.msra.mxu0 %v2334
      %2388 = vmatprep.subr.mxu0 0.0
      %2389 = vmatpush1.msra.mxu0 %v2333
      %2390 = vmatprep.subr.mxu0 0.0
      %2391 = vmatpush1.msra.mxu0 %v2332
      %2392 = vmatprep.subr.mxu0 0.0
      %2393 = vmatpush1.msra.mxu0 %v2331
      %2394 = vmatprep.subr.mxu0 0.0
      %2395 = vmatpush1.msra.mxu0 %v2330
      %2396 = vmatprep.subr.mxu0 0.0
      %2397 = vmatpush1.msra.mxu0 %v2329
      %2398 = vmatprep.subr.mxu0 0.0
      %2399 = vmatpush1.msra.mxu0 %v2328
      %2400 = vmatprep.subr.mxu0 0.0
      %2401 = vmatpush1.msra.mxu0 %v2327
      %2402 = vmatprep.subr.mxu0 0.0
      %2403 = vmatpush1.msra.mxu0 %v2326
      %2404 = vmatprep.subr.mxu0 0.0
      %2405 = vmatpush1.msra.mxu0 %v2325
      %2406 = vmatprep.subr.mxu0 0.0
      %2407 = vmatpush1.msra.mxu0 %v2324
      %2408 = vmatprep.subr.mxu0 0.0
      %2409 = vmatpush1.msra.mxu0 %v2323
      %2410 = vmatprep.subr.mxu0 0.0
      %2411 = vmatpush1.msra.mxu0 %v2322
      %2412 = vmatprep.subr.mxu0 0.0
      %2413 = vmatpush1.msra.mxu0 %v2321
      %2414 = vmatprep.subr.mxu0 0.0
      %2415 = vmatpush1.msra.mxu0 %v2320
      %2416 = vmatprep.subr.mxu0 0.0
      %2417 = vmatpush2.msra.mxu0 %v2351
      %2418 = vmatprep.subr.mxu0 0.0
      %2419 = vmatpush2.msra.mxu0 %v2350
      %2420 = vmatprep.subr.mxu0 0.0
      %2421 = vmatpush2.msra.mxu0 %v2349
      %2422 = vmatprep.subr.mxu0 0.0
      %2423 = vmatpush2.msra.mxu0 %v2348
      %2424 = vmatprep.subr.mxu0 0.0
      %2425 = vmatpush2.msra.mxu0 %v2347
      %2426 = vmatprep.subr.mxu0 0.0
      %2427 = vmatpush2.msra.mxu0 %v2346
      %2428 = vmatprep.subr.mxu0 0.0
      %2429 = vmatpush2.msra.mxu0 %v2345
      %2430 = vmatprep.subr.mxu0 0.0
      %2431 = vmatpush2.msra.mxu0 %v2344
      %2432 = vmatprep.subr.mxu0 0.0
      %2433 = vmatpush2.msra.mxu0 %v2343
      %2434 = vmatprep.subr.mxu0 0.0
      %2435 = vmatpush2.msra.mxu0 %v2342
      %2436 = vmatprep.subr.mxu0 0.0
      %2437 = vmatpush2.msra.mxu0 %v2341
      %2438 = vmatprep.subr.mxu0 0.0
      %2439 = vmatpush2.msra.mxu0 %v2340
      %2440 = vmatprep.subr.mxu0 0.0
      %2441 = vmatpush2.msra.mxu0 %v2339
      %2442 = vmatprep.subr.mxu0 0.0
      %2443 = vmatpush2.msra.mxu0 %v2338
      %2444 = vmatprep.subr.mxu0 0.0
      %2445 = vmatpush2.msra.mxu0 %v2337
      %2446 = vmatprep.subr.mxu0 0.0
      %2447 = vmatpush2.msra.mxu0 %v2336
      %2448 = vmatprep.mubr.f32.mxu0 %v2289
      %2449 = vmatmul.mubr.f32.gmra.mxu0 %v2288
      %v2450 = vpop.f32.mrf.mxu0
      %v2451 = vadd.f32 0.0, %v2450
      %v2452 = vpop.f32.mrf.mxu0
      %2453 = vmatprep.mubr.f32.mxu0 %v2293
      %2454 = vmatmul.mubr.f32.gmra.mxu0 %v2292
      %v2455 = vpop.f32.mrf.mxu0
      %v2456 = vadd.f32 0.0, %v2455
      %v2457 = vpop.f32.mrf.mxu0
      %2458 = vmatprep.mubr.f32.mxu0 %v2297
      %2459 = vmatmul.mubr.f32.gmra.mxu0 %v2296
      %v2460 = vpop.f32.mrf.mxu0
      %v2461 = vadd.f32 0.0, %v2460
      %v2462 = vpop.f32.mrf.mxu0
      %2463 = vmatprep.mubr.f32.mxu0 %v2301
      %2464 = vmatmul.mubr.f32.gmra.mxu0 %v2300
      %v2465 = vpop.f32.mrf.mxu0
      %v2466 = vadd.f32 0.0, %v2465
      %v2467 = vpop.f32.mrf.mxu0
      %2468 = vmatprep.mubr.f32.mxu0 %v2305
      %2469 = vmatmul.mubr.f32.gmra.mxu0 %v2304
      %v2470 = vpop.f32.mrf.mxu0
      %v2471 = vadd.f32 0.0, %v2470
      %v2472 = vpop.f32.mrf.mxu0
      %2473 = vmatprep.mubr.f32.mxu0 %v2309
      %2474 = vmatmul.mubr.f32.gmra.mxu0 %v2308
      %v2475 = vpop.f32.mrf.mxu0
      %v2476 = vadd.f32 0.0, %v2475
      %v2477 = vpop.f32.mrf.mxu0
      %2478 = vmatprep.mubr.f32.mxu0 %v2313
      %2479 = vmatmul.mubr.f32.gmra.mxu0 %v2312
      %v2480 = vpop.f32.mrf.mxu0
      %v2481 = vadd.f32 0.0, %v2480
      %v2482 = vpop.f32.mrf.mxu0
      %2483 = vmatprep.mubr.f32.mxu0 %v2317
      %2484 = vmatmul.mubr.f32.gmra.mxu0 %v2316
      %v2485 = vpop.f32.mrf.mxu0
      %v2486 = vadd.f32 0.0, %v2485
      %v2487 = vpop.f32.mrf.mxu0
      %2488 = vdwg.mxu0
      %2489 = vmatprep.subr.mxu0 0.0
      %2490 = vmatpush1.msra.mxu0 %v2367
      %2491 = vmatprep.subr.mxu0 0.0
      %2492 = vmatpush1.msra.mxu0 %v2366
      %2493 = vmatprep.subr.mxu0 0.0
      %2494 = vmatpush1.msra.mxu0 %v2365
      %2495 = vmatprep.subr.mxu0 0.0
      %2496 = vmatpush1.msra.mxu0 %v2364
      %2497 = vmatprep.subr.mxu0 0.0
      %2498 = vmatpush1.msra.mxu0 %v2363
      %2499 = vmatprep.subr.mxu0 0.0
      %2500 = vmatpush1.msra.mxu0 %v2362
      %2501 = vmatprep.subr.mxu0 0.0
      %2502 = vmatpush1.msra.mxu0 %v2361
      %2503 = vmatprep.subr.mxu0 0.0
      %2504 = vmatpush1.msra.mxu0 %v2360
      %2505 = vmatprep.subr.mxu0 0.0
      %2506 = vmatpush1.msra.mxu0 %v2359
      %2507 = vmatprep.subr.mxu0 0.0
      %2508 = vmatpush1.msra.mxu0 %v2358
      %2509 = vmatprep.subr.mxu0 0.0
      %2510 = vmatpush1.msra.mxu0 %v2357
      %2511 = vmatprep.subr.mxu0 0.0
      %2512 = vmatpush1.msra.mxu0 %v2356
      %2513 = vmatprep.subr.mxu0 0.0
      %2514 = vmatpush1.msra.mxu0 %v2355
      %2515 = vmatprep.subr.mxu0 0.0
      %2516 = vmatpush1.msra.mxu0 %v2354
      %2517 = vmatprep.subr.mxu0 0.0
      %2518 = vmatpush1.msra.mxu0 %v2353
      %2519 = vmatprep.subr.mxu0 0.0
      %2520 = vmatpush1.msra.mxu0 %v2352
      %2521 = vmatprep.subr.mxu0 0.0
      %2522 = vmatpush2.msra.mxu0 %v2383
      %2523 = vmatprep.subr.mxu0 0.0
      %2524 = vmatpush2.msra.mxu0 %v2382
      %2525 = vmatprep.subr.mxu0 0.0
      %2526 = vmatpush2.msra.mxu0 %v2381
      %2527 = vmatprep.subr.mxu0 0.0
      %2528 = vmatpush2.msra.mxu0 %v2380
      %2529 = vmatprep.subr.mxu0 0.0
      %2530 = vmatpush2.msra.mxu0 %v2379
      %2531 = vmatprep.subr.mxu0 0.0
      %2532 = vmatpush2.msra.mxu0 %v2378
      %2533 = vmatprep.subr.mxu0 0.0
      %2534 = vmatpush2.msra.mxu0 %v2377
      %2535 = vmatprep.subr.mxu0 0.0
      %2536 = vmatpush2.msra.mxu0 %v2376
      %2537 = vmatprep.subr.mxu0 0.0
      %2538 = vmatpush2.msra.mxu0 %v2375
      %2539 = vmatprep.subr.mxu0 0.0
      %2540 = vmatpush2.msra.mxu0 %v2374
      %2541 = vmatprep.subr.mxu0 0.0
      %2542 = vmatpush2.msra.mxu0 %v2373
      %2543 = vmatprep.subr.mxu0 0.0
      %2544 = vmatpush2.msra.mxu0 %v2372
      %2545 = vmatprep.subr.mxu0 0.0
      %2546 = vmatpush2.msra.mxu0 %v2371
      %2547 = vmatprep.subr.mxu0 0.0
      %2548 = vmatpush2.msra.mxu0 %v2370
      %2549 = vmatprep.subr.mxu0 0.0
      %2550 = vmatpush2.msra.mxu0 %v2369
      %2551 = vmatprep.subr.mxu0 0.0
      %2552 = vmatpush2.msra.mxu0 %v2368
      %2553 = vmatprep.mubr.f32.mxu0 %v2291
      %2554 = vmatmul.mubr.f32.gmra.mxu0 %v2290
      %v2555 = vpop.f32.mrf.mxu0
      %v2556 = vadd.f32 %v2451, %v2555
      %v2557 = vpop.f32.mrf.mxu0
      %2558 = vmatprep.mubr.f32.mxu0 %v2295
      %2559 = vmatmul.mubr.f32.gmra.mxu0 %v2294
      %v2560 = vpop.f32.mrf.mxu0
      %v2561 = vadd.f32 %v2456, %v2560
      %v2562 = vpop.f32.mrf.mxu0
      %2563 = vmatprep.mubr.f32.mxu0 %v2299
      %2564 = vmatmul.mubr.f32.gmra.mxu0 %v2298
      %v2565 = vpop.f32.mrf.mxu0
      %v2566 = vadd.f32 %v2461, %v2565
      %v2567 = vpop.f32.mrf.mxu0
      %2568 = vmatprep.mubr.f32.mxu0 %v2303
      %2569 = vmatmul.mubr.f32.gmra.mxu0 %v2302
      %v2570 = vpop.f32.mrf.mxu0
      %v2571 = vadd.f32 %v2466, %v2570
      %v2572 = vpop.f32.mrf.mxu0
      %2573 = vmatprep.mubr.f32.mxu0 %v2307
      %2574 = vmatmul.mubr.f32.gmra.mxu0 %v2306
      %v2575 = vpop.f32.mrf.mxu0
      %v2576 = vadd.f32 %v2471, %v2575
      %v2577 = vpop.f32.mrf.mxu0
      %2578 = vmatprep.mubr.f32.mxu0 %v2311
      %2579 = vmatmul.mubr.f32.gmra.mxu0 %v2310
      %v2580 = vpop.f32.mrf.mxu0
      %v2581 = vadd.f32 %v2476, %v2580
      %v2582 = vpop.f32.mrf.mxu0
      %2583 = vmatprep.mubr.f32.mxu0 %v2315
      %2584 = vmatmul.mubr.f32.gmra.mxu0 %v2314
      %v2585 = vpop.f32.mrf.mxu0
      %v2586 = vadd.f32 %v2481, %v2585
      %v2587 = vpop.f32.mrf.mxu0
      %2588 = vmatprep.mubr.f32.mxu0 %v2319
      %2589 = vmatmul.mubr.f32.gmra.mxu0 %v2318
      %v2590 = vpop.f32.mrf.mxu0
      %v2591 = vadd.f32 %v2486, %v2590
      %v2592 = vpop.f32.mrf.mxu0
      %2593 = vdwg.mxu0
      %v2594 = vld [vmem:[%s7] sm:$0xff]
      %v2595 = vld [vmem:[%s7 + $0x8] sm:$0x3]
      %v2596 = vld [vmem:[%s8] sm:$0xff]
      %v2597 = vld [vmem:[%s8 + $0x8] sm:$0x3]
      %2599 = vset.pattern.permute.xlu0 0
      %2600 = vperm.xlu0 %2599, %v2596
      %v2601 = vpop.permute.xlu0 %2600
      %2604 = vset.pattern.permute.xlu0 0
      %2605 = vperm.xlu0 %2604, %v2597
      %v2606 = vpop.permute.xlu0 %2605
      %vm2608 = vcmask 523264
      %v2610 = vsel %vm2608, %v2594, 0
      %v2613 = vsel %vm2608, %v2595, 0
      %2615 = vmatprep.subr.mxu0 0.0
      %2616 = vmatpush1.msra.mxu0 0.0
      %2617 = vmatprep.subr.mxu0 0.0
      %2618 = vmatpush1.msra.mxu0 0.0
      %2619 = vmatprep.subr.mxu0 0.0
      %2620 = vmatpush1.msra.mxu0 0.0
      %2621 = vmatprep.subr.mxu0 0.0
      %2622 = vmatpush1.msra.mxu0 0.0
      %2623 = vmatprep.subr.mxu0 0.0
      %2624 = vmatpush1.msra.mxu0 0.0
      %2625 = vmatprep.subr.mxu0 0.0
      %2626 = vmatpush1.msra.mxu0 0.0
      %2627 = vmatprep.subr.mxu0 0.0
      %2628 = vmatpush1.msra.mxu0 0.0
      %2629 = vmatprep.subr.mxu0 0.0
      %2630 = vmatpush1.msra.mxu0 0.0
      %2631 = vmatprep.subr.mxu0 0.0
      %2632 = vmatpush1.msra.mxu0 %v2591
      %2633 = vmatprep.subr.mxu0 0.0
      %2634 = vmatpush1.msra.mxu0 %v2586
      %2635 = vmatprep.subr.mxu0 0.0
      %2636 = vmatpush1.msra.mxu0 %v2581
      %2637 = vmatprep.subr.mxu0 0.0
      %2638 = vmatpush1.msra.mxu0 %v2576
      %2639 = vmatprep.subr.mxu0 0.0
      %2640 = vmatpush1.msra.mxu0 %v2571
      %2641 = vmatprep.subr.mxu0 0.0
      %2642 = vmatpush1.msra.mxu0 %v2566
      %2643 = vmatprep.subr.mxu0 0.0
      %2644 = vmatpush1.msra.mxu0 %v2561
      %2645 = vmatprep.subr.mxu0 0.0
      %2646 = vmatpush1.msra.mxu0 %v2556
      %2647 = vmatprep.subr.mxu0 0.0
      %2648 = vmatpush2.msra.mxu0 0.0
      %2649 = vmatprep.subr.mxu0 0.0
      %2650 = vmatpush2.msra.mxu0 0.0
      %2651 = vmatprep.subr.mxu0 0.0
      %2652 = vmatpush2.msra.mxu0 0.0
      %2653 = vmatprep.subr.mxu0 0.0
      %2654 = vmatpush2.msra.mxu0 0.0
      %2655 = vmatprep.subr.mxu0 0.0
      %2656 = vmatpush2.msra.mxu0 0.0
      %2657 = vmatprep.subr.mxu0 0.0
      %2658 = vmatpush2.msra.mxu0 0.0
      %2659 = vmatprep.subr.mxu0 0.0
      %2660 = vmatpush2.msra.mxu0 0.0
      %2661 = vmatprep.subr.mxu0 0.0
      %2662 = vmatpush2.msra.mxu0 0.0
      %2663 = vmatprep.subr.mxu0 0.0
      %2664 = vmatpush2.msra.mxu0 0.0
      %2665 = vmatprep.subr.mxu0 0.0
      %2666 = vmatpush2.msra.mxu0 0.0
      %2667 = vmatprep.subr.mxu0 0.0
      %2668 = vmatpush2.msra.mxu0 0.0
      %2669 = vmatprep.subr.mxu0 0.0
      %2670 = vmatpush2.msra.mxu0 0.0
      %2671 = vmatprep.subr.mxu0 0.0
      %2672 = vmatpush2.msra.mxu0 0.0
      %2673 = vmatprep.subr.mxu0 0.0
      %2674 = vmatpush2.msra.mxu0 0.0
      %2675 = vmatprep.subr.mxu0 0.0
      %2676 = vmatpush2.msra.mxu0 0.0
      %2677 = vmatprep.subr.mxu0 0.0
      %2678 = vmatpush2.msra.mxu0 0.0
      %2679 = vmatprep.mubr.f32.mxu0 0.0
      %2680 = vmatmul.mubr.f32.gmra.mxu0 %v2610
      %v2681 = vpop.f32.mrf.mxu0
      %v2682 = vadd.f32 %v2601, %v2681
      %v2683 = vpop.f32.mrf.mxu0
      %2684 = vmatprep.mubr.f32.mxu0 0.0
      %2685 = vmatmul.mubr.f32.gmra.mxu0 %v2613
      %v2686 = vpop.f32.mrf.mxu0
      %v2687 = vadd.f32 %v2606, %v2686
      %v2688 = vpop.f32.mrf.mxu0
      %2689 = vdwg.mxu0
      %2690 = vst.msk [vmem:[%s359] sm:$0xff] %vm1034, %v2682
      %vm2691 = vcmask 58368
      %2692 = vst.msk [vmem:[%s359 + $0x8] sm:$0x3] %vm2691, %v2687
      %p2693 = scmp.lt.s32.totalorder %s21, 1
      %s2694 = scalar_select %p2693, %s21, 1
      %s2695 = smul.addr %s2694, 2
      %s2696 = smul.addr %s2695, 8
      %s2697 = scalar_lea.vmem %s10, %s2696
      // Predicated region
      $region61: #{conv1d_speech_forward.1} parent=59 // pred_check
        %p2698 = pneg %p254
      $region62: #{conv1d_speech_forward.1} parent=59 // pred_check_branch
        %2700 = sbr.rel (%p2698) target = $region64
      $region63: #{conv1d_speech_forward.1} parent=59 // pred_region
        _
      $region64: #{conv1d_speech_forward.1} parent=59 // pred_fallthru
        _
    $region60: #{conv1d_speech_forward.1} parent=5 // pred_fallthru
      _
    %p2701 = scmp.le.s32.totalorder 2, %s16
    // Predicated region
    $region65: #{conv1d_speech_forward.1} parent=5 // pred_check
      %p2702 = pneg %p2701
    $region66: #{conv1d_speech_forward.1} parent=5 // pred_check_branch
      %2704 = sbr.rel (%p2702) target = $region68
    $region67: #{conv1d_speech_forward.1} parent=5 // pred_region
      %s2705 = ssub.s32 %s16, 2
      // Predicated region
      $region69: #{conv1d_speech_forward.1} parent=67 // pred_check
        %p2706 = pneg %p260
      $region70: #{conv1d_speech_forward.1} parent=67 // pred_check_branch
        %2708 = sbr.rel (%p2706) target = $region72
      $region71: #{conv1d_speech_forward.1} parent=67 // pred_region
        %p2709 = scmp.lt.s32.totalorder %s22, 1
        %s2710 = scalar_select %p2709, %s22, 1
        %s2711 = smul.addr %s2710, 2
        %s2712 = smul.addr %s2711, 8
        %s2713 = scalar_lea.vmem %s10, %s2712
      $region72: #{conv1d_speech_forward.1} parent=67 // pred_fallthru
        _
    $region68: #{conv1d_speech_forward.1} parent=5 // pred_fallthru
      _
  $region6: #{conv1d_speech_forward.1} parent=0 // loop_footer
    %s20 = sadd.s32 1, %s16
  $region7: #{conv1d_speech_forward.1} parent=0 // loop_footer_branch
    %15 = sbr.rel target = $region3
  $region8: #{conv1d_speech_forward.1} parent=0 // loop_exit
    _

</llo_original>
